<compile_context>
chip_gen: v7x
topology: tpu7x:2x2x1
jax: 0.10.0
libtpu: 0.0.40
codegen_flags: <defaults>
</compile_context>

<pallas_src>
import functools

import jax
import jax.numpy as jnp
from jax.experimental import pallas as pl
from jax.experimental.pallas import tpu as pltpu


def _round_up(n, m):
    return ((n + m - 1) // m) * m


def decoder_kernel(x_ref, wih_ref, whh_ref, bias_ref, fcw_ref, fcb_ref, out_ref,
                   *, num_layers, seq_len, batch):
    """Whole decoder forward in a single kernel invocation (no grid).

    x_ref    : (S*Bp, H)   input sequence, time-major rows, batch padded to Bp
    wih_ref  : (L, H, H)   input->hidden weights, [layer, in, out]
    whh_ref  : (L, H, H)   hidden->hidden weights, [layer, in, out]
    bias_ref : (L, 1, H)   fused bias (b_ih + b_hh), precomputed in wrapper
    fcw_ref  : (H, Zp)     final linear weight, [in, out], Z zero-padded to 128 lanes
    fcb_ref  : (1, Zp)     final linear bias (zero-padded)
    out_ref  : (S*Bp, Zp)  output rows
    """
    S, Bp = seq_len, batch
    H = x_ref.shape[1]

    inp = x_ref[...]                                   # (S*Bp, H) value
    for layer in range(num_layers):                    # static, unrolled over layers
        # Hoisted out of the recurrence: one big matmul over all timesteps + fused
        # bias, kept as a VALUE (a handful of vregs at these shapes) -- no VMEM
        # scratch round-trip, no per-step reload.
        proj = (jnp.dot(inp, wih_ref[layer], preferred_element_type=jnp.float32)
                + bias_ref[layer])
        w_hh = whh_ref[layer]                          # (H, H)

        # TODO(synk): weight-stationary MXU (pltpu.matmul_push_rhs / matmul_acc_lhs /
        # matmul_pop) would remove the per-step RHS push from the serial chain, but at
        # (8,32)@(32,32) -- far below the MXU tile -- the explicit-MXU path is not
        # robust to lower; keep jnp.dot on the recurrence for correctness.
        h = jnp.zeros((Bp, H), jnp.float32)
        outs = []
        # Fully-unrolled static time loop: h and every h_new stay in vregs, so the
        # serial chain has zero per-step VMEM loads/stores (no vst.msk / vld per step).
        # TODO(synk): for large S switch to lax.fori_loop with partial unroll (4 or 8)
        # plus a dynamic-sliced VMEM scratch to bound instruction memory / live ranges.
        for t in range(S):
            h = jnp.tanh(proj[t * Bp:(t + 1) * Bp, :]
                         + jnp.dot(h, w_hh, preferred_element_type=jnp.float32))
            outs.append(h)
        inp = jnp.concatenate(outs, axis=0)            # (S*Bp, H): one dense value/layer

    # fc: one lane-dense matmul over all timesteps; single unmasked output store.
    out_ref[...] = (jnp.dot(inp, fcw_ref[...], preferred_element_type=jnp.float32)
                    + fcb_ref[...])


def decoder_forward(x_enc, w_ih_pt, w_hh_pt, b_ih_pt, b_hh_pt, fc_w_pt, fc_b_pt):
    """x_enc: (S, B, H) f32.  Weights in PyTorch layout:
       w_*_pt: (L, H, H) [out, in]; b_*_pt: (L, H); fc_w_pt: (Z, H); fc_b_pt: (Z,)."""
    S, B, H = x_enc.shape
    L = w_ih_pt.shape[0]
    Z = fc_w_pt.shape[0]

    Bp = _round_up(B, 8)      # sublane-aligned per-timestep row blocks
    Zp = _round_up(Z, 128)    # lane-dense output stores

    # MXU-friendly [in, out] layouts; fused bias; zero-padded fc projection.
    w_ih = jnp.transpose(w_ih_pt, (0, 2, 1)).astype(jnp.float32)
    w_hh = jnp.transpose(w_hh_pt, (0, 2, 1)).astype(jnp.float32)
    bias = (b_ih_pt + b_hh_pt).reshape(L, 1, H).astype(jnp.float32)
    fc_w = jnp.zeros((H, Zp), jnp.float32).at[:, :Z].set(fc_w_pt.T)
    fc_b = jnp.zeros((1, Zp), jnp.float32).at[:, :Z].set(fc_b_pt)

    # Pad batch and flatten time into the row dim: (S*Bp, H).
    x_p = jnp.zeros((S, Bp, H), jnp.float32).at[:, :B, :].set(x_enc)
    x_2d = x_p.reshape(S * Bp, H)

    # VMEM budget guard: everything (input, weights, output, live activation values)
    # is held resident inside one invocation. If this ever approaches the scoped VMEM
    # limit (smallest default 16 MiB on v5e; v7x has half the physical VMEM of
    # v5e/v6e), tile over batch with a "parallel" grid axis -- whole sequence per grid
    # step, never per-timestep -- and set pltpu.CompilerParams(vmem_limit_bytes=...).
    vmem_bytes = 4 * (S * Bp * H                      # input rows
                      + 2 * L * H * H + L * H         # RNN weights + fused bias
                      + H * Zp + Zp                   # fc weight + bias
                      + S * Bp * Zp                   # output rows
                      + 3 * S * Bp * H)               # live values (inp/proj/outs)
    if vmem_bytes > 8 * 1024 * 1024:
        # TODO(synk): add the batch-grid tiling path before scaling S*B this far.
        raise ValueError(
            f"Decoder residency {vmem_bytes} B exceeds safe VMEM budget; "
            "add batch-grid tiling.")

    # Advisory cost for XLA's scheduler around this latency-bound custom call.
    cost = pl.CostEstimate(
        flops=2 * L * S * Bp * H * H        # hoisted X @ W_ih per layer
              + 2 * L * S * Bp * H * H      # recurrent h @ W_hh per layer
              + 2 * S * Bp * H * Zp,        # fc
        transcendentals=L * S * Bp * H,     # tanh
        bytes_accessed=4 * (S * Bp * H + 2 * L * H * H + L * H
                            + H * Zp + Zp + S * Bp * Zp),
    )

    # TODO(synk): on v7x (2 TCs), for multi-sequence workloads add a leading
    # "parallel" grid axis over independent batch groups (full recurrence per step);
    # at B=4 / one sequence batch there is nothing to shard.
    kernel = functools.partial(decoder_kernel, num_layers=L, seq_len=S, batch=Bp)
    out_2d = pl.pallas_call(
        kernel,
        out_shape=jax.ShapeDtypeStruct((S * Bp, Zp), jnp.float32),
        in_specs=[pl.BlockSpec(memory_space=pltpu.MemorySpace.VMEM)
                  for _ in range(6)],
        out_specs=pl.BlockSpec(memory_space=pltpu.MemorySpace.VMEM),
        cost_estimate=cost,
    )(x_2d, w_ih, w_hh, bias, fc_w, fc_b)

    return out_2d.reshape(S, Bp, Zp)[:, :B, :Z]


def ref_decoder(x, w_ih_pt, w_hh_pt, b_ih_pt, b_hh_pt, fc_w_pt, fc_b_pt):
    """Pure-JAX reference mirroring torch.nn.RNN(tanh) + nn.Linear semantics."""
    S, B, H = x.shape
    L = w_ih_pt.shape[0]
    layer_in = x
    for l in range(L):
        h = jnp.zeros((B, H), jnp.float32)
        outs = []
        for t in range(S):
            h = jnp.tanh(layer_in[t] @ w_ih_pt[l].T + b_ih_pt[l]
                         + h @ w_hh_pt[l].T + b_hh_pt[l])
            outs.append(h)
        layer_in = jnp.stack(outs, axis=0)
    return layer_in @ fc_w_pt.T + fc_b_pt


if __name__ == "__main__":
    # Shapes implied by the module: hidden_dim=32, z_dim=16, num_layer=2;
    # sequence length 8, batch 4 (seq-major, matching nn.RNN's default layout).
    S, B, H, Z, L = 8, 4, 32, 16, 2

    key = jax.random.PRNGKey(0)
    ks = jax.random.split(key, 7)
    bound = 1.0 / jnp.sqrt(H)  # PyTorch default init range for RNN/Linear

    # Parameters in PyTorch layout: weight matrices are (out_features, in_features).
    w_ih_pt = jax.random.uniform(ks[0], (L, H, H), jnp.float32, -bound, bound)
    w_hh_pt = jax.random.uniform(ks[1], (L, H, H), jnp.float32, -bound, bound)
    b_ih_pt = jax.random.uniform(ks[2], (L, H), jnp.float32, -bound, bound)
    b_hh_pt = jax.random.uniform(ks[3], (L, H), jnp.float32, -bound, bound)
    fc_w_pt = jax.random.uniform(ks[4], (Z, H), jnp.float32, -bound, bound)
    fc_b_pt = jax.random.uniform(ks[5], (Z,), jnp.float32, -bound, bound)

    x_enc = jax.random.normal(ks[6], (S, B, H), jnp.float32)

    out = decoder_forward(x_enc, w_ih_pt, w_hh_pt, b_ih_pt, b_hh_pt,
                          fc_w_pt, fc_b_pt)
    out = jax.block_until_ready(out)

    expected = ref_decoder(x_enc, w_ih_pt, w_hh_pt, b_ih_pt, b_hh_pt,
                           fc_w_pt, fc_b_pt)
    assert out.shape == (S, B, Z)
    assert jnp.allclose(out, expected, atol=1e-5, rtol=1e-5), "mismatch vs reference"

    print("KERNEL_OK")
</pallas_src>

<mosaic_0001>
module attributes {stable_mosaic.version = 11 : i64} {
  func.func @decoder_kernel(%arg0: memref<64x32xf32, #tpu.memory_space<vmem>>, %arg1: memref<2x32x32xf32, #tpu.memory_space<vmem>>, %arg2: memref<2x32x32xf32, #tpu.memory_space<vmem>>, %arg3: memref<2x1x32xf32, #tpu.memory_space<vmem>>, %arg4: memref<32x128xf32, #tpu.memory_space<vmem>>, %arg5: memref<1x128xf32, #tpu.memory_space<vmem>>, %arg6: memref<64x128xf32, #tpu.memory_space<vmem>>) attributes {dimension_semantics = [], scalar_prefetch = 0 : i64, scratch_operands = 0 : i64, tpu.core_type = #tpu.core_type<tc>} {
    %c0 = arith.constant 0 : index
    %c0_0 = arith.constant 0 : index
    %0 = vector.load %arg0[%c0, %c0_0] : memref<64x32xf32, #tpu.memory_space<vmem>>, vector<64x32xf32>
    %c0_1 = arith.constant 0 : index
    %c0_2 = arith.constant 0 : index
    %c0_3 = arith.constant 0 : index
    %1 = vector.load %arg1[%c0_1, %c0_2, %c0_3] : memref<2x32x32xf32, #tpu.memory_space<vmem>>, vector<1x32x32xf32>
    %2 = vector.shape_cast %1 : vector<1x32x32xf32> to vector<32x32xf32>
    %cst = arith.constant dense<0.000000e+00> : vector<64x32xf32>
    %3 = tpu.matmul %0, %2, %cst {dimension_numbers = #tpu.dot_dimension_numbers<[1], [0], [0], [1], [0, 0, 1, 1], [], []>} : vector<64x32xf32>, vector<32x32xf32>, vector<64x32xf32> -> vector<64x32xf32>
    %c0_4 = arith.constant 0 : index
    %c0_5 = arith.constant 0 : index
    %c0_6 = arith.constant 0 : index
    %4 = vector.load %arg3[%c0_4, %c0_5, %c0_6] : memref<2x1x32xf32, #tpu.memory_space<vmem>>, vector<1x1x32xf32>
    %5 = vector.shape_cast %4 : vector<1x1x32xf32> to vector<1x32xf32>
    %6 = vector.broadcast %5 : vector<1x32xf32> to vector<64x32xf32>
    %7 = arith.addf %3, %6 : vector<64x32xf32>
    %c0_7 = arith.constant 0 : index
    %c0_8 = arith.constant 0 : index
    %c0_9 = arith.constant 0 : index
    %8 = vector.load %arg2[%c0_7, %c0_8, %c0_9] : memref<2x32x32xf32, #tpu.memory_space<vmem>>, vector<1x32x32xf32>
    %9 = vector.shape_cast %8 : vector<1x32x32xf32> to vector<32x32xf32>
    %cst_10 = arith.constant 0.000000e+00 : f32
    %10 = vector.broadcast %cst_10 : f32 to vector<8x32xf32>
    %11 = vector.extract_strided_slice %7 {offsets = [0, 0], sizes = [8, 32], strides = [1, 1]} : vector<64x32xf32> to vector<8x32xf32>
    %cst_11 = arith.constant dense<0.000000e+00> : vector<8x32xf32>
    %12 = tpu.matmul %10, %9, %cst_11 {dimension_numbers = #tpu.dot_dimension_numbers<[1], [0], [0], [1], [0, 0, 1, 1], [], []>} : vector<8x32xf32>, vector<32x32xf32>, vector<8x32xf32> -> vector<8x32xf32>
    %13 = arith.addf %11, %12 : vector<8x32xf32>
    %14 = math.tanh %13 : vector<8x32xf32>
    %15 = vector.extract_strided_slice %7 {offsets = [8, 0], sizes = [8, 32], strides = [1, 1]} : vector<64x32xf32> to vector<8x32xf32>
    %cst_12 = arith.constant dense<0.000000e+00> : vector<8x32xf32>
    %16 = tpu.matmul %14, %9, %cst_12 {dimension_numbers = #tpu.dot_dimension_numbers<[1], [0], [0], [1], [0, 0, 1, 1], [], []>} : vector<8x32xf32>, vector<32x32xf32>, vector<8x32xf32> -> vector<8x32xf32>
    %17 = arith.addf %15, %16 : vector<8x32xf32>
    %18 = math.tanh %17 : vector<8x32xf32>
    %19 = vector.extract_strided_slice %7 {offsets = [16, 0], sizes = [8, 32], strides = [1, 1]} : vector<64x32xf32> to vector<8x32xf32>
    %cst_13 = arith.constant dense<0.000000e+00> : vector<8x32xf32>
    %20 = tpu.matmul %18, %9, %cst_13 {dimension_numbers = #tpu.dot_dimension_numbers<[1], [0], [0], [1], [0, 0, 1, 1], [], []>} : vector<8x32xf32>, vector<32x32xf32>, vector<8x32xf32> -> vector<8x32xf32>
    %21 = arith.addf %19, %20 : vector<8x32xf32>
    %22 = math.tanh %21 : vector<8x32xf32>
    %23 = vector.extract_strided_slice %7 {offsets = [24, 0], sizes = [8, 32], strides = [1, 1]} : vector<64x32xf32> to vector<8x32xf32>
    %cst_14 = arith.constant dense<0.000000e+00> : vector<8x32xf32>
    %24 = tpu.matmul %22, %9, %cst_14 {dimension_numbers = #tpu.dot_dimension_numbers<[1], [0], [0], [1], [0, 0, 1, 1], [], []>} : vector<8x32xf32>, vector<32x32xf32>, vector<8x32xf32> -> vector<8x32xf32>
    %25 = arith.addf %23, %24 : vector<8x32xf32>
    %26 = math.tanh %25 : vector<8x32xf32>
    %27 = vector.extract_strided_slice %7 {offsets = [32, 0], sizes = [8, 32], strides = [1, 1]} : vector<64x32xf32> to vector<8x32xf32>
    %cst_15 = arith.constant dense<0.000000e+00> : vector<8x32xf32>
    %28 = tpu.matmul %26, %9, %cst_15 {dimension_numbers = #tpu.dot_dimension_numbers<[1], [0], [0], [1], [0, 0, 1, 1], [], []>} : vector<8x32xf32>, vector<32x32xf32>, vector<8x32xf32> -> vector<8x32xf32>
    %29 = arith.addf %27, %28 : vector<8x32xf32>
    %30 = math.tanh %29 : vector<8x32xf32>
    %31 = vector.extract_strided_slice %7 {offsets = [40, 0], sizes = [8, 32], strides = [1, 1]} : vector<64x32xf32> to vector<8x32xf32>
    %cst_16 = arith.constant dense<0.000000e+00> : vector<8x32xf32>
    %32 = tpu.matmul %30, %9, %cst_16 {dimension_numbers = #tpu.dot_dimension_numbers<[1], [0], [0], [1], [0, 0, 1, 1], [], []>} : vector<8x32xf32>, vector<32x32xf32>, vector<8x32xf32> -> vector<8x32xf32>
    %33 = arith.addf %31, %32 : vector<8x32xf32>
    %34 = math.tanh %33 : vector<8x32xf32>
    %35 = vector.extract_strided_slice %7 {offsets = [48, 0], sizes = [8, 32], strides = [1, 1]} : vector<64x32xf32> to vector<8x32xf32>
    %cst_17 = arith.constant dense<0.000000e+00> : vector<8x32xf32>
    %36 = tpu.matmul %34, %9, %cst_17 {dimension_numbers = #tpu.dot_dimension_numbers<[1], [0], [0], [1], [0, 0, 1, 1], [], []>} : vector<8x32xf32>, vector<32x32xf32>, vector<8x32xf32> -> vector<8x32xf32>
    %37 = arith.addf %35, %36 : vector<8x32xf32>
    %38 = math.tanh %37 : vector<8x32xf32>
    %39 = vector.extract_strided_slice %7 {offsets = [56, 0], sizes = [8, 32], strides = [1, 1]} : vector<64x32xf32> to vector<8x32xf32>
    %cst_18 = arith.constant dense<0.000000e+00> : vector<8x32xf32>
    %40 = tpu.matmul %38, %9, %cst_18 {dimension_numbers = #tpu.dot_dimension_numbers<[1], [0], [0], [1], [0, 0, 1, 1], [], []>} : vector<8x32xf32>, vector<32x32xf32>, vector<8x32xf32> -> vector<8x32xf32>
    %41 = arith.addf %39, %40 : vector<8x32xf32>
    %42 = math.tanh %41 : vector<8x32xf32>
    %43 = tpu.concatenate %14, %18, %22, %26, %30, %34, %38, %42 in 0 : vector<8x32xf32>, vector<8x32xf32>, vector<8x32xf32>, vector<8x32xf32>, vector<8x32xf32>, vector<8x32xf32>, vector<8x32xf32>, vector<8x32xf32> -> vector<64x32xf32>
    %c1 = arith.constant 1 : index
    %c0_19 = arith.constant 0 : index
    %c0_20 = arith.constant 0 : index
    %44 = vector.load %arg1[%c1, %c0_19, %c0_20] : memref<2x32x32xf32, #tpu.memory_space<vmem>>, vector<1x32x32xf32>
    %45 = vector.shape_cast %44 : vector<1x32x32xf32> to vector<32x32xf32>
    %cst_21 = arith.constant dense<0.000000e+00> : vector<64x32xf32>
    %46 = tpu.matmul %43, %45, %cst_21 {dimension_numbers = #tpu.dot_dimension_numbers<[1], [0], [0], [1], [0, 0, 1, 1], [], []>} : vector<64x32xf32>, vector<32x32xf32>, vector<64x32xf32> -> vector<64x32xf32>
    %c1_22 = arith.constant 1 : index
    %c0_23 = arith.constant 0 : index
    %c0_24 = arith.constant 0 : index
    %47 = vector.load %arg3[%c1_22, %c0_23, %c0_24] : memref<2x1x32xf32, #tpu.memory_space<vmem>>, vector<1x1x32xf32>
    %48 = vector.shape_cast %47 : vector<1x1x32xf32> to vector<1x32xf32>
    %49 = vector.broadcast %48 : vector<1x32xf32> to vector<64x32xf32>
    %50 = arith.addf %46, %49 : vector<64x32xf32>
    %c1_25 = arith.constant 1 : index
    %c0_26 = arith.constant 0 : index
    %c0_27 = arith.constant 0 : index
    %51 = vector.load %arg2[%c1_25, %c0_26, %c0_27] : memref<2x32x32xf32, #tpu.memory_space<vmem>>, vector<1x32x32xf32>
    %52 = vector.shape_cast %51 : vector<1x32x32xf32> to vector<32x32xf32>
    %cst_28 = arith.constant 0.000000e+00 : f32
    %53 = vector.broadcast %cst_28 : f32 to vector<8x32xf32>
    %54 = vector.extract_strided_slice %50 {offsets = [0, 0], sizes = [8, 32], strides = [1, 1]} : vector<64x32xf32> to vector<8x32xf32>
    %cst_29 = arith.constant dense<0.000000e+00> : vector<8x32xf32>
    %55 = tpu.matmul %53, %52, %cst_29 {dimension_numbers = #tpu.dot_dimension_numbers<[1], [0], [0], [1], [0, 0, 1, 1], [], []>} : vector<8x32xf32>, vector<32x32xf32>, vector<8x32xf32> -> vector<8x32xf32>
    %56 = arith.addf %54, %55 : vector<8x32xf32>
    %57 = math.tanh %56 : vector<8x32xf32>
    %58 = vector.extract_strided_slice %50 {offsets = [8, 0], sizes = [8, 32], strides = [1, 1]} : vector<64x32xf32> to vector<8x32xf32>
    %cst_30 = arith.constant dense<0.000000e+00> : vector<8x32xf32>
    %59 = tpu.matmul %57, %52, %cst_30 {dimension_numbers = #tpu.dot_dimension_numbers<[1], [0], [0], [1], [0, 0, 1, 1], [], []>} : vector<8x32xf32>, vector<32x32xf32>, vector<8x32xf32> -> vector<8x32xf32>
    %60 = arith.addf %58, %59 : vector<8x32xf32>
    %61 = math.tanh %60 : vector<8x32xf32>
    %62 = vector.extract_strided_slice %50 {offsets = [16, 0], sizes = [8, 32], strides = [1, 1]} : vector<64x32xf32> to vector<8x32xf32>
    %cst_31 = arith.constant dense<0.000000e+00> : vector<8x32xf32>
    %63 = tpu.matmul %61, %52, %cst_31 {dimension_numbers = #tpu.dot_dimension_numbers<[1], [0], [0], [1], [0, 0, 1, 1], [], []>} : vector<8x32xf32>, vector<32x32xf32>, vector<8x32xf32> -> vector<8x32xf32>
    %64 = arith.addf %62, %63 : vector<8x32xf32>
    %65 = math.tanh %64 : vector<8x32xf32>
    %66 = vector.extract_strided_slice %50 {offsets = [24, 0], sizes = [8, 32], strides = [1, 1]} : vector<64x32xf32> to vector<8x32xf32>
    %cst_32 = arith.constant dense<0.000000e+00> : vector<8x32xf32>
    %67 = tpu.matmul %65, %52, %cst_32 {dimension_numbers = #tpu.dot_dimension_numbers<[1], [0], [0], [1], [0, 0, 1, 1], [], []>} : vector<8x32xf32>, vector<32x32xf32>, vector<8x32xf32> -> vector<8x32xf32>
    %68 = arith.addf %66, %67 : vector<8x32xf32>
    %69 = math.tanh %68 : vector<8x32xf32>
    %70 = vector.extract_strided_slice %50 {offsets = [32, 0], sizes = [8, 32], strides = [1, 1]} : vector<64x32xf32> to vector<8x32xf32>
    %cst_33 = arith.constant dense<0.000000e+00> : vector<8x32xf32>
    %71 = tpu.matmul %69, %52, %cst_33 {dimension_numbers = #tpu.dot_dimension_numbers<[1], [0], [0], [1], [0, 0, 1, 1], [], []>} : vector<8x32xf32>, vector<32x32xf32>, vector<8x32xf32> -> vector<8x32xf32>
    %72 = arith.addf %70, %71 : vector<8x32xf32>
    %73 = math.tanh %72 : vector<8x32xf32>
    %74 = vector.extract_strided_slice %50 {offsets = [40, 0], sizes = [8, 32], strides = [1, 1]} : vector<64x32xf32> to vector<8x32xf32>
    %cst_34 = arith.constant dense<0.000000e+00> : vector<8x32xf32>
    %75 = tpu.matmul %73, %52, %cst_34 {dimension_numbers = #tpu.dot_dimension_numbers<[1], [0], [0], [1], [0, 0, 1, 1], [], []>} : vector<8x32xf32>, vector<32x32xf32>, vector<8x32xf32> -> vector<8x32xf32>
    %76 = arith.addf %74, %75 : vector<8x32xf32>
    %77 = math.tanh %76 : vector<8x32xf32>
    %78 = vector.extract_strided_slice %50 {offsets = [48, 0], sizes = [8, 32], strides = [1, 1]} : vector<64x32xf32> to vector<8x32xf32>
    %cst_35 = arith.constant dense<0.000000e+00> : vector<8x32xf32>
    %79 = tpu.matmul %77, %52, %cst_35 {dimension_numbers = #tpu.dot_dimension_numbers<[1], [0], [0], [1], [0, 0, 1, 1], [], []>} : vector<8x32xf32>, vector<32x32xf32>, vector<8x32xf32> -> vector<8x32xf32>
    %80 = arith.addf %78, %79 : vector<8x32xf32>
    %81 = math.tanh %80 : vector<8x32xf32>
    %82 = vector.extract_strided_slice %50 {offsets = [56, 0], sizes = [8, 32], strides = [1, 1]} : vector<64x32xf32> to vector<8x32xf32>
    %cst_36 = arith.constant dense<0.000000e+00> : vector<8x32xf32>
    %83 = tpu.matmul %81, %52, %cst_36 {dimension_numbers = #tpu.dot_dimension_numbers<[1], [0], [0], [1], [0, 0, 1, 1], [], []>} : vector<8x32xf32>, vector<32x32xf32>, vector<8x32xf32> -> vector<8x32xf32>
    %84 = arith.addf %82, %83 : vector<8x32xf32>
    %85 = math.tanh %84 : vector<8x32xf32>
    %86 = tpu.concatenate %57, %61, %65, %69, %73, %77, %81, %85 in 0 : vector<8x32xf32>, vector<8x32xf32>, vector<8x32xf32>, vector<8x32xf32>, vector<8x32xf32>, vector<8x32xf32>, vector<8x32xf32>, vector<8x32xf32> -> vector<64x32xf32>
    %c0_37 = arith.constant 0 : index
    %c0_38 = arith.constant 0 : index
    %87 = vector.load %arg4[%c0_37, %c0_38] : memref<32x128xf32, #tpu.memory_space<vmem>>, vector<32x128xf32>
    %cst_39 = arith.constant dense<0.000000e+00> : vector<64x128xf32>
    %88 = tpu.matmul %86, %87, %cst_39 {dimension_numbers = #tpu.dot_dimension_numbers<[1], [0], [0], [1], [0, 0, 1, 1], [], []>} : vector<64x32xf32>, vector<32x128xf32>, vector<64x128xf32> -> vector<64x128xf32>
    %c0_40 = arith.constant 0 : index
    %c0_41 = arith.constant 0 : index
    %89 = vector.load %arg5[%c0_40, %c0_41] : memref<1x128xf32, #tpu.memory_space<vmem>>, vector<1x128xf32>
    %90 = vector.broadcast %89 : vector<1x128xf32> to vector<64x128xf32>
    %91 = arith.addf %88, %90 : vector<64x128xf32>
    %c0_42 = arith.constant 0 : index
    %c0_43 = arith.constant 0 : index
    %92 = vector.load %arg6[%c0_42, %c0_43] : memref<64x128xf32, #tpu.memory_space<vmem>>, vector<64x128xf32>
    tpu.vector_store %arg6[%c0_42, %c0_43], %91 {strides = array<i32>} : memref<64x128xf32, #tpu.memory_space<vmem>>, vector<64x128xf32>,
    return
  }
}

</mosaic_0001>

<llo_original>
// kernel: tpu_custom_call.1
$region0: #{tpu_custom_call.1}
  #allocation0 [shape = 'u32[]', space=smem, size = 0x4, offset = 0x4, fixed_abs, tag = 'smem constant byte address 0x4 - core index']
  #allocation1 [shape = 'u32[144,128]{1,0:T(1,128)}', space=vmem, size = 0x12000, scoped, tag = 'internal scratch']
  %s0 = inlined_call_operand.vmem [shape: f32[64,32], index: 0, kind: input, shape index: {}]
  %s1 = inlined_call_operand.vmem [shape: f32[2,32,32], index: 1, kind: input, shape index: {}]
  %s2 = inlined_call_operand.hbm [shape: f32[2,32,32], index: 2, kind: input, shape index: {}]
  %s3 = inlined_call_operand.vmem [shape: f32[2,1,32], index: 3, kind: input, shape index: {}]
  %s4 = inlined_call_operand.vmem [shape: f32[32,128], index: 4, kind: input, shape index: {}]
  %s5 = inlined_call_operand.vmem [shape: f32[1,128], index: 5, kind: input, shape index: {}]
  %s6 = inlined_call_operand.hbm [shape: f32[64,128], index: 6, kind: output, shape index: {}]
  %s7 = sld [smem:[#allocation0]]
  $region38: #{tpu_custom_call.1} parent=0
    _
  %s9 = ssub.s32 1, %s7
  %s10 = scalar_select 0, %s9, %s7
  $region1: #{tpu_custom_call.1} parent=0
    #allocation2 [shape = 'u8[32768]{0}', space=vmem, size = 0x8000, scoped, tag = 'input window, operand 2, single buffered']
    #allocation3 [shape = 's32[1]{0}', space=sflag, size = 0x4, scoped, tag = 'scoped memory for tpu_custom_call.1']
    #allocation4 [shape = 's32[1]{0}', space=sflag, size = 0x4, scoped, tag = 'scoped memory for tpu_custom_call.1']
    #allocation5 [shape = 'u8[32768]{0}', space=vmem, size = 0x8000, scoped, tag = 'output window, operand 0, single buffered']
    %11 = vsyncpa [#allocation3], 0
    %12 = vsyncpa [#allocation4], 0
    // Predicated region
    $region2: #{tpu_custom_call.1} parent=1 // pred_check
      _
    $region3: #{tpu_custom_call.1} parent=1 // pred_check_branch
      %14 = sbr.rel (0) target = $region5
    $region4: #{tpu_custom_call.1} parent=1 // pred_region
      _
    $region5: #{tpu_custom_call.1} parent=1 // pred_fallthru
      _
    // Predicated region
    $region6: #{tpu_custom_call.1} parent=1 // pred_check
      _
    $region7: #{tpu_custom_call.1} parent=1 // pred_check_branch
      %16 = sbr.rel (0) target = $region9
    $region8: #{tpu_custom_call.1} parent=1 // pred_region
      _
    $region9: #{tpu_custom_call.1} parent=1 // pred_fallthru
      _
    // Predicated region
    $region10: #{tpu_custom_call.1} parent=1 // pred_check
      _
    $region11: #{tpu_custom_call.1} parent=1 // pred_check_branch
      %18 = sbr.rel (0) target = $region13
    $region12: #{tpu_custom_call.1} parent=1 // pred_region
      %s20 = ssub.s32 1024, 1024
      %21 = vsyncadd [#allocation3], %s20
      %s22 = sshll.u32 [#allocation2], 4
      %s23 = int_to_ptr.vmem [resolvable:$true] %s22
      %28 = dma.hbm_to_vmem [thread:$0]  %s2, 1024, %s23, [#allocation3], 128, 128, 8
    $region13: #{tpu_custom_call.1} parent=1 // pred_fallthru
      _
    // Predicated region
    $region14: #{tpu_custom_call.1} parent=1 // pred_check
      _
    $region15: #{tpu_custom_call.1} parent=1 // pred_check_branch
      %30 = sbr.rel (0) target = $region17
    $region16: #{tpu_custom_call.1} parent=1 // pred_region
      _
    $region17: #{tpu_custom_call.1} parent=1 // pred_fallthru
      _
    // Predicated region
    $region18: #{tpu_custom_call.1} parent=1 // pred_check
      _
    $region19: #{tpu_custom_call.1} parent=1 // pred_check_branch
      %32 = sbr.rel (0) target = $region21
    $region20: #{tpu_custom_call.1} parent=1 // pred_region
      _
    $region21: #{tpu_custom_call.1} parent=1 // pred_fallthru
      _
    // Predicated region
    $region22: #{tpu_custom_call.1} parent=1 // pred_check
      _
    $region23: #{tpu_custom_call.1} parent=1 // pred_check_branch
      %34 = sbr.rel (0) target = $region25
    $region24: #{tpu_custom_call.1} parent=1 // pred_region
      _
    $region25: #{tpu_custom_call.1} parent=1 // pred_fallthru
      _
    // Predicated region
    $region26: #{tpu_custom_call.1} parent=1 // pred_check
      _
    $region27: #{tpu_custom_call.1} parent=1 // pred_check_branch
      %36 = sbr.rel (0) target = $region29
    $region28: #{tpu_custom_call.1} parent=1 // pred_region
      %37 = dma.done [#allocation3], 1024
    $region29: #{tpu_custom_call.1} parent=1 // pred_fallthru
      _
    %v38 = vld [vmem:[%s0] sm:$0xff]
    %v39 = vld [vmem:[%s0 + $0x8] sm:$0xff]
    %v40 = vld [vmem:[%s0 + $0x10] sm:$0xff]
    %v41 = vld [vmem:[%s0 + $0x18] sm:$0xff]
    %v42 = vld [vmem:[%s0 + $0x20] sm:$0xff]
    %v43 = vld [vmem:[%s0 + $0x28] sm:$0xff]
    %v44 = vld [vmem:[%s0 + $0x30] sm:$0xff]
    %v45 = vld [vmem:[%s0 + $0x38] sm:$0xff]
    %v46 = vld [vmem:[%s1] sm:$0xff]
    %v47 = vld [vmem:[%s1 + $0x8] sm:$0xff]
    %v48 = vld [vmem:[%s1 + $0x10] sm:$0xff]
    %v49 = vld [vmem:[%s1 + $0x18] sm:$0xff]
    %v50 = vld [vmem:[%s3] sm:$0x1]
    %v52 = vlaneseq
    %v53 = vshrl.u32 %v52, 7
    %v54 = vsub.s32 0, %v53
    %v55 = vrot.slane %v50, %v54
    %vm57 = vcmask 261120
    %v59 = vsel %vm57, %v38, 0
    %v62 = vsel %vm57, %v39, 0
    %v65 = vsel %vm57, %v40, 0
    %v68 = vsel %vm57, %v41, 0
    %v71 = vsel %vm57, %v42, 0
    %v74 = vsel %vm57, %v43, 0
    %v77 = vsel %vm57, %v44, 0
    %v80 = vsel %vm57, %v45, 0
    %82 = vmatprep.subr.mxu0 0.0
    %83 = vmatpush1.msra.mxu0 %v46
    %84 = vmatprep.subr.mxu0 0.0
    %85 = vmatpush1.msra.mxu0 %v47
    %86 = vmatprep.subr.mxu0 0.0
    %87 = vmatpush1.msra.mxu0 %v48
    %88 = vmatprep.subr.mxu0 0.0
    %89 = vmatpush1.msra.mxu0 %v49
    %90 = vmatprep.subr.mxu0 0.0
    %91 = vmatpush1.msra.mxu0 0.0
    %92 = vmatprep.subr.mxu0 0.0
    %93 = vmatpush1.msra.mxu0 0.0
    %94 = vmatprep.subr.mxu0 0.0
    %95 = vmatpush1.msra.mxu0 0.0
    %96 = vmatprep.subr.mxu0 0.0
    %97 = vmatpush1.msra.mxu0 0.0
    %98 = vmatprep.subr.mxu0 0.0
    %99 = vmatpush1.msra.mxu0 0.0
    %100 = vmatprep.subr.mxu0 0.0
    %101 = vmatpush1.msra.mxu0 0.0
    %102 = vmatprep.subr.mxu0 0.0
    %103 = vmatpush1.msra.mxu0 0.0
    %104 = vmatprep.subr.mxu0 0.0
    %105 = vmatpush1.msra.mxu0 0.0
    %106 = vmatprep.subr.mxu0 0.0
    %107 = vmatpush1.msra.mxu0 0.0
    %108 = vmatprep.subr.mxu0 0.0
    %109 = vmatpush1.msra.mxu0 0.0
    %110 = vmatprep.subr.mxu0 0.0
    %111 = vmatpush1.msra.mxu0 0.0
    %112 = vmatprep.subr.mxu0 0.0
    %113 = vmatpush1.msra.mxu0 0.0
    %114 = vmatprep.subr.mxu0 0.0
    %115 = vmatpush1.msra.mxu0 0.0
    %116 = vmatprep.subr.mxu0 0.0
    %117 = vmatpush1.msra.mxu0 0.0
    %118 = vmatprep.subr.mxu0 0.0
    %119 = vmatpush1.msra.mxu0 0.0
    %120 = vmatprep.subr.mxu0 0.0
    %121 = vmatpush1.msra.mxu0 0.0
    %122 = vmatprep.subr.mxu0 0.0
    %123 = vmatpush1.msra.mxu0 0.0
    %124 = vmatprep.subr.mxu0 0.0
    %125 = vmatpush1.msra.mxu0 0.0
    %126 = vmatprep.subr.mxu0 0.0
    %127 = vmatpush1.msra.mxu0 0.0
    %128 = vmatprep.subr.mxu0 0.0
    %129 = vmatpush1.msra.mxu0 0.0
    %130 = vmatprep.subr.mxu0 0.0
    %131 = vmatpush1.msra.mxu0 0.0
    %132 = vmatprep.subr.mxu0 0.0
    %133 = vmatpush1.msra.mxu0 0.0
    %134 = vmatprep.subr.mxu0 0.0
    %135 = vmatpush1.msra.mxu0 0.0
    %136 = vmatprep.subr.mxu0 0.0
    %137 = vmatpush1.msra.mxu0 0.0
    %138 = vmatprep.subr.mxu0 0.0
    %139 = vmatpush1.msra.mxu0 0.0
    %140 = vmatprep.subr.mxu0 0.0
    %141 = vmatpush1.msra.mxu0 0.0
    %142 = vmatprep.subr.mxu0 0.0
    %143 = vmatpush1.msra.mxu0 0.0
    %144 = vmatprep.subr.mxu0 0.0
    %145 = vmatpush1.msra.mxu0 0.0
    %146 = vmatprep.mubr.f32.mxu0 0.0
    %147 = vmatmul.mubr.f32.gmra.mrb[0].mxu0 %v59
    %v148 = vpop.f32.mrb[0].mxu0
    %v149 = vadd.f32 %v55, %v148
    %v150 = vpop.f32.mrb[0].mxu0
    %151 = vmatprep.mubr.f32.mxu0 0.0
    %152 = vmatmul.mubr.f32.gmra.mrb[0].mxu0 %v62
    %v153 = vpop.f32.mrb[0].mxu0
    %v154 = vadd.f32 %v55, %v153
    %v155 = vpop.f32.mrb[0].mxu0
    %156 = vmatprep.mubr.f32.mxu0 0.0
    %157 = vmatmul.mubr.f32.gmra.mrb[0].mxu0 %v65
    %v158 = vpop.f32.mrb[0].mxu0
    %v159 = vadd.f32 %v55, %v158
    %v160 = vpop.f32.mrb[0].mxu0
    %161 = vmatprep.mubr.f32.mxu0 0.0
    %162 = vmatmul.mubr.f32.gmra.mrb[0].mxu0 %v68
    %v163 = vpop.f32.mrb[0].mxu0
    %v164 = vadd.f32 %v55, %v163
    %v165 = vpop.f32.mrb[0].mxu0
    %166 = vmatprep.mubr.f32.mxu0 0.0
    %167 = vmatmul.mubr.f32.gmra.mrb[0].mxu0 %v71
    %v168 = vpop.f32.mrb[0].mxu0
    %v169 = vadd.f32 %v55, %v168
    %v170 = vpop.f32.mrb[0].mxu0
    %171 = vmatprep.mubr.f32.mxu0 0.0
    %172 = vmatmul.mubr.f32.gmra.mrb[0].mxu0 %v74
    %v173 = vpop.f32.mrb[0].mxu0
    %v174 = vadd.f32 %v55, %v173
    %v175 = vpop.f32.mrb[0].mxu0
    %176 = vmatprep.mubr.f32.mxu0 0.0
    %177 = vmatmul.mubr.f32.gmra.mrb[0].mxu0 %v77
    %v178 = vpop.f32.mrb[0].mxu0
    %v179 = vadd.f32 %v55, %v178
    %v180 = vpop.f32.mrb[0].mxu0
    %181 = vmatprep.mubr.f32.mxu0 0.0
    %182 = vmatmul.mubr.f32.gmra.mrb[0].mxu0 %v80
    %v183 = vpop.f32.mrb[0].mxu0
    %v184 = vadd.f32 %v55, %v183
    %v185 = vpop.f32.mrb[0].mxu0
    %186 = vdwg.mxu0
    %v187 = vld [vmem:[#allocation2] sm:$0xff]
    %v188 = vld [vmem:[#allocation2 + $0x8] sm:$0xff]
    %v189 = vld [vmem:[#allocation2 + $0x10] sm:$0xff]
    %v190 = vld [vmem:[#allocation2 + $0x18] sm:$0xff]
    %v192 = vsel %vm57, 0.0, 0
    %194 = vmatprep.subr.mxu0 0.0
    %195 = vmatpush1.msra.mxu0 %v187
    %196 = vmatprep.subr.mxu0 0.0
    %197 = vmatpush1.msra.mxu0 %v188
    %198 = vmatprep.subr.mxu0 0.0
    %199 = vmatpush1.msra.mxu0 %v189
    %200 = vmatprep.subr.mxu0 0.0
    %201 = vmatpush1.msra.mxu0 %v190
    %202 = vmatprep.subr.mxu0 0.0
    %203 = vmatpush1.msra.mxu0 0.0
    %204 = vmatprep.subr.mxu0 0.0
    %205 = vmatpush1.msra.mxu0 0.0
    %206 = vmatprep.subr.mxu0 0.0
    %207 = vmatpush1.msra.mxu0 0.0
    %208 = vmatprep.subr.mxu0 0.0
    %209 = vmatpush1.msra.mxu0 0.0
    %210 = vmatprep.subr.mxu0 0.0
    %211 = vmatpush1.msra.mxu0 0.0
    %212 = vmatprep.subr.mxu0 0.0
    %213 = vmatpush1.msra.mxu0 0.0
    %214 = vmatprep.subr.mxu0 0.0
    %215 = vmatpush1.msra.mxu0 0.0
    %216 = vmatprep.subr.mxu0 0.0
    %217 = vmatpush1.msra.mxu0 0.0
    %218 = vmatprep.subr.mxu0 0.0
    %219 = vmatpush1.msra.mxu0 0.0
    %220 = vmatprep.subr.mxu0 0.0
    %221 = vmatpush1.msra.mxu0 0.0
    %222 = vmatprep.subr.mxu0 0.0
    %223 = vmatpush1.msra.mxu0 0.0
    %224 = vmatprep.subr.mxu0 0.0
    %225 = vmatpush1.msra.mxu0 0.0
    %226 = vmatprep.subr.mxu0 0.0
    %227 = vmatpush1.msra.mxu0 0.0
    %228 = vmatprep.subr.mxu0 0.0
    %229 = vmatpush1.msra.mxu0 0.0
    %230 = vmatprep.subr.mxu0 0.0
    %231 = vmatpush1.msra.mxu0 0.0
    %232 = vmatprep.subr.mxu0 0.0
    %233 = vmatpush1.msra.mxu0 0.0
    %234 = vmatprep.subr.mxu0 0.0
    %235 = vmatpush1.msra.mxu0 0.0
    %236 = vmatprep.subr.mxu0 0.0
    %237 = vmatpush1.msra.mxu0 0.0
    %238 = vmatprep.subr.mxu0 0.0
    %239 = vmatpush1.msra.mxu0 0.0
    %240 = vmatprep.subr.mxu0 0.0
    %241 = vmatpush1.msra.mxu0 0.0
    %242 = vmatprep.subr.mxu0 0.0
    %243 = vmatpush1.msra.mxu0 0.0
    %244 = vmatprep.subr.mxu0 0.0
    %245 = vmatpush1.msra.mxu0 0.0
    %246 = vmatprep.subr.mxu0 0.0
    %247 = vmatpush1.msra.mxu0 0.0
    %248 = vmatprep.subr.mxu0 0.0
    %249 = vmatpush1.msra.mxu0 0.0
    %250 = vmatprep.subr.mxu0 0.0
    %251 = vmatpush1.msra.mxu0 0.0
    %252 = vmatprep.subr.mxu0 0.0
    %253 = vmatpush1.msra.mxu0 0.0
    %254 = vmatprep.subr.mxu0 0.0
    %255 = vmatpush1.msra.mxu0 0.0
    %256 = vmatprep.subr.mxu0 0.0
    %257 = vmatpush1.msra.mxu0 0.0
    %258 = vmatprep.mubr.f32.mxu0 0.0
    %259 = vmatmul.mubr.f32.gmra.mrb[0].mxu0 %v192
    %v260 = vpop.f32.mrb[0].mxu0
    %v261 = vadd.f32 0.0, %v260
    %v262 = vpop.f32.mrb[0].mxu0
    %263 = vdwg.mxu0
    %v264 = vadd.f32 %v149, %v261
    %v265 = vtanh.pop %v264
    %v267 = vsel %vm57, %v265, 0
    %269 = vmatprep.subr.mxu0 0.0
    %270 = vmatpush1.msra.mxu0 %v187
    %271 = vmatprep.subr.mxu0 0.0
    %272 = vmatpush1.msra.mxu0 %v188
    %273 = vmatprep.subr.mxu0 0.0
    %274 = vmatpush1.msra.mxu0 %v189
    %275 = vmatprep.subr.mxu0 0.0
    %276 = vmatpush1.msra.mxu0 %v190
    %277 = vmatprep.subr.mxu0 0.0
    %278 = vmatpush1.msra.mxu0 0.0
    %279 = vmatprep.subr.mxu0 0.0
    %280 = vmatpush1.msra.mxu0 0.0
    %281 = vmatprep.subr.mxu0 0.0
    %282 = vmatpush1.msra.mxu0 0.0
    %283 = vmatprep.subr.mxu0 0.0
    %284 = vmatpush1.msra.mxu0 0.0
    %285 = vmatprep.subr.mxu0 0.0
    %286 = vmatpush1.msra.mxu0 0.0
    %287 = vmatprep.subr.mxu0 0.0
    %288 = vmatpush1.msra.mxu0 0.0
    %289 = vmatprep.subr.mxu0 0.0
    %290 = vmatpush1.msra.mxu0 0.0
    %291 = vmatprep.subr.mxu0 0.0
    %292 = vmatpush1.msra.mxu0 0.0
    %293 = vmatprep.subr.mxu0 0.0
    %294 = vmatpush1.msra.mxu0 0.0
    %295 = vmatprep.subr.mxu0 0.0
    %296 = vmatpush1.msra.mxu0 0.0
    %297 = vmatprep.subr.mxu0 0.0
    %298 = vmatpush1.msra.mxu0 0.0
    %299 = vmatprep.subr.mxu0 0.0
    %300 = vmatpush1.msra.mxu0 0.0
    %301 = vmatprep.subr.mxu0 0.0
    %302 = vmatpush1.msra.mxu0 0.0
    %303 = vmatprep.subr.mxu0 0.0
    %304 = vmatpush1.msra.mxu0 0.0
    %305 = vmatprep.subr.mxu0 0.0
    %306 = vmatpush1.msra.mxu0 0.0
    %307 = vmatprep.subr.mxu0 0.0
    %308 = vmatpush1.msra.mxu0 0.0
    %309 = vmatprep.subr.mxu0 0.0
    %310 = vmatpush1.msra.mxu0 0.0
    %311 = vmatprep.subr.mxu0 0.0
    %312 = vmatpush1.msra.mxu0 0.0
    %313 = vmatprep.subr.mxu0 0.0
    %314 = vmatpush1.msra.mxu0 0.0
    %315 = vmatprep.subr.mxu0 0.0
    %316 = vmatpush1.msra.mxu0 0.0
    %317 = vmatprep.subr.mxu0 0.0
    %318 = vmatpush1.msra.mxu0 0.0
    %319 = vmatprep.subr.mxu0 0.0
    %320 = vmatpush1.msra.mxu0 0.0
    %321 = vmatprep.subr.mxu0 0.0
    %322 = vmatpush1.msra.mxu0 0.0
    %323 = vmatprep.subr.mxu0 0.0
    %324 = vmatpush1.msra.mxu0 0.0
    %325 = vmatprep.subr.mxu0 0.0
    %326 = vmatpush1.msra.mxu0 0.0
    %327 = vmatprep.subr.mxu0 0.0
    %328 = vmatpush1.msra.mxu0 0.0
    %329 = vmatprep.subr.mxu0 0.0
    %330 = vmatpush1.msra.mxu0 0.0
    %331 = vmatprep.subr.mxu0 0.0
    %332 = vmatpush1.msra.mxu0 0.0
    %333 = vmatprep.mubr.f32.mxu0 0.0
    %334 = vmatmul.mubr.f32.gmra.mrb[0].mxu0 %v267
    %v335 = vpop.f32.mrb[0].mxu0
    %v336 = vadd.f32 0.0, %v335
    %v337 = vpop.f32.mrb[0].mxu0
    %338 = vdwg.mxu0
    %v339 = vadd.f32 %v154, %v336
    %v340 = vtanh.pop %v339
    %v342 = vsel %vm57, %v340, 0
    %344 = vmatprep.subr.mxu0 0.0
    %345 = vmatpush1.msra.mxu0 %v187
    %346 = vmatprep.subr.mxu0 0.0
    %347 = vmatpush1.msra.mxu0 %v188
    %348 = vmatprep.subr.mxu0 0.0
    %349 = vmatpush1.msra.mxu0 %v189
    %350 = vmatprep.subr.mxu0 0.0
    %351 = vmatpush1.msra.mxu0 %v190
    %352 = vmatprep.subr.mxu0 0.0
    %353 = vmatpush1.msra.mxu0 0.0
    %354 = vmatprep.subr.mxu0 0.0
    %355 = vmatpush1.msra.mxu0 0.0
    %356 = vmatprep.subr.mxu0 0.0
    %357 = vmatpush1.msra.mxu0 0.0
    %358 = vmatprep.subr.mxu0 0.0
    %359 = vmatpush1.msra.mxu0 0.0
    %360 = vmatprep.subr.mxu0 0.0
    %361 = vmatpush1.msra.mxu0 0.0
    %362 = vmatprep.subr.mxu0 0.0
    %363 = vmatpush1.msra.mxu0 0.0
    %364 = vmatprep.subr.mxu0 0.0
    %365 = vmatpush1.msra.mxu0 0.0
    %366 = vmatprep.subr.mxu0 0.0
    %367 = vmatpush1.msra.mxu0 0.0
    %368 = vmatprep.subr.mxu0 0.0
    %369 = vmatpush1.msra.mxu0 0.0
    %370 = vmatprep.subr.mxu0 0.0
    %371 = vmatpush1.msra.mxu0 0.0
    %372 = vmatprep.subr.mxu0 0.0
    %373 = vmatpush1.msra.mxu0 0.0
    %374 = vmatprep.subr.mxu0 0.0
    %375 = vmatpush1.msra.mxu0 0.0
    %376 = vmatprep.subr.mxu0 0.0
    %377 = vmatpush1.msra.mxu0 0.0
    %378 = vmatprep.subr.mxu0 0.0
    %379 = vmatpush1.msra.mxu0 0.0
    %380 = vmatprep.subr.mxu0 0.0
    %381 = vmatpush1.msra.mxu0 0.0
    %382 = vmatprep.subr.mxu0 0.0
    %383 = vmatpush1.msra.mxu0 0.0
    %384 = vmatprep.subr.mxu0 0.0
    %385 = vmatpush1.msra.mxu0 0.0
    %386 = vmatprep.subr.mxu0 0.0
    %387 = vmatpush1.msra.mxu0 0.0
    %388 = vmatprep.subr.mxu0 0.0
    %389 = vmatpush1.msra.mxu0 0.0
    %390 = vmatprep.subr.mxu0 0.0
    %391 = vmatpush1.msra.mxu0 0.0
    %392 = vmatprep.subr.mxu0 0.0
    %393 = vmatpush1.msra.mxu0 0.0
    %394 = vmatprep.subr.mxu0 0.0
    %395 = vmatpush1.msra.mxu0 0.0
    %396 = vmatprep.subr.mxu0 0.0
    %397 = vmatpush1.msra.mxu0 0.0
    %398 = vmatprep.subr.mxu0 0.0
    %399 = vmatpush1.msra.mxu0 0.0
    %400 = vmatprep.subr.mxu0 0.0
    %401 = vmatpush1.msra.mxu0 0.0
    %402 = vmatprep.subr.mxu0 0.0
    %403 = vmatpush1.msra.mxu0 0.0
    %404 = vmatprep.subr.mxu0 0.0
    %405 = vmatpush1.msra.mxu0 0.0
    %406 = vmatprep.subr.mxu0 0.0
    %407 = vmatpush1.msra.mxu0 0.0
    %408 = vmatprep.mubr.f32.mxu0 0.0
    %409 = vmatmul.mubr.f32.gmra.mrb[0].mxu0 %v342
    %v410 = vpop.f32.mrb[0].mxu0
    %v411 = vadd.f32 0.0, %v410
    %v412 = vpop.f32.mrb[0].mxu0
    %413 = vdwg.mxu0
    %v414 = vadd.f32 %v159, %v411
    %v415 = vtanh.pop %v414
    %v417 = vsel %vm57, %v415, 0
    %419 = vmatprep.subr.mxu0 0.0
    %420 = vmatpush1.msra.mxu0 %v187
    %421 = vmatprep.subr.mxu0 0.0
    %422 = vmatpush1.msra.mxu0 %v188
    %423 = vmatprep.subr.mxu0 0.0
    %424 = vmatpush1.msra.mxu0 %v189
    %425 = vmatprep.subr.mxu0 0.0
    %426 = vmatpush1.msra.mxu0 %v190
    %427 = vmatprep.subr.mxu0 0.0
    %428 = vmatpush1.msra.mxu0 0.0
    %429 = vmatprep.subr.mxu0 0.0
    %430 = vmatpush1.msra.mxu0 0.0
    %431 = vmatprep.subr.mxu0 0.0
    %432 = vmatpush1.msra.mxu0 0.0
    %433 = vmatprep.subr.mxu0 0.0
    %434 = vmatpush1.msra.mxu0 0.0
    %435 = vmatprep.subr.mxu0 0.0
    %436 = vmatpush1.msra.mxu0 0.0
    %437 = vmatprep.subr.mxu0 0.0
    %438 = vmatpush1.msra.mxu0 0.0
    %439 = vmatprep.subr.mxu0 0.0
    %440 = vmatpush1.msra.mxu0 0.0
    %441 = vmatprep.subr.mxu0 0.0
    %442 = vmatpush1.msra.mxu0 0.0
    %443 = vmatprep.subr.mxu0 0.0
    %444 = vmatpush1.msra.mxu0 0.0
    %445 = vmatprep.subr.mxu0 0.0
    %446 = vmatpush1.msra.mxu0 0.0
    %447 = vmatprep.subr.mxu0 0.0
    %448 = vmatpush1.msra.mxu0 0.0
    %449 = vmatprep.subr.mxu0 0.0
    %450 = vmatpush1.msra.mxu0 0.0
    %451 = vmatprep.subr.mxu0 0.0
    %452 = vmatpush1.msra.mxu0 0.0
    %453 = vmatprep.subr.mxu0 0.0
    %454 = vmatpush1.msra.mxu0 0.0
    %455 = vmatprep.subr.mxu0 0.0
    %456 = vmatpush1.msra.mxu0 0.0
    %457 = vmatprep.subr.mxu0 0.0
    %458 = vmatpush1.msra.mxu0 0.0
    %459 = vmatprep.subr.mxu0 0.0
    %460 = vmatpush1.msra.mxu0 0.0
    %461 = vmatprep.subr.mxu0 0.0
    %462 = vmatpush1.msra.mxu0 0.0
    %463 = vmatprep.subr.mxu0 0.0
    %464 = vmatpush1.msra.mxu0 0.0
    %465 = vmatprep.subr.mxu0 0.0
    %466 = vmatpush1.msra.mxu0 0.0
    %467 = vmatprep.subr.mxu0 0.0
    %468 = vmatpush1.msra.mxu0 0.0
    %469 = vmatprep.subr.mxu0 0.0
    %470 = vmatpush1.msra.mxu0 0.0
    %471 = vmatprep.subr.mxu0 0.0
    %472 = vmatpush1.msra.mxu0 0.0
    %473 = vmatprep.subr.mxu0 0.0
    %474 = vmatpush1.msra.mxu0 0.0
    %475 = vmatprep.subr.mxu0 0.0
    %476 = vmatpush1.msra.mxu0 0.0
    %477 = vmatprep.subr.mxu0 0.0
    %478 = vmatpush1.msra.mxu0 0.0
    %479 = vmatprep.subr.mxu0 0.0
    %480 = vmatpush1.msra.mxu0 0.0
    %481 = vmatprep.subr.mxu0 0.0
    %482 = vmatpush1.msra.mxu0 0.0
    %483 = vmatprep.mubr.f32.mxu0 0.0
    %484 = vmatmul.mubr.f32.gmra.mrb[0].mxu0 %v417
    %v485 = vpop.f32.mrb[0].mxu0
    %v486 = vadd.f32 0.0, %v485
    %v487 = vpop.f32.mrb[0].mxu0
    %488 = vdwg.mxu0
    %v489 = vadd.f32 %v164, %v486
    %v490 = vtanh.pop %v489
    %v492 = vsel %vm57, %v490, 0
    %494 = vmatprep.subr.mxu0 0.0
    %495 = vmatpush1.msra.mxu0 %v187
    %496 = vmatprep.subr.mxu0 0.0
    %497 = vmatpush1.msra.mxu0 %v188
    %498 = vmatprep.subr.mxu0 0.0
    %499 = vmatpush1.msra.mxu0 %v189
    %500 = vmatprep.subr.mxu0 0.0
    %501 = vmatpush1.msra.mxu0 %v190
    %502 = vmatprep.subr.mxu0 0.0
    %503 = vmatpush1.msra.mxu0 0.0
    %504 = vmatprep.subr.mxu0 0.0
    %505 = vmatpush1.msra.mxu0 0.0
    %506 = vmatprep.subr.mxu0 0.0
    %507 = vmatpush1.msra.mxu0 0.0
    %508 = vmatprep.subr.mxu0 0.0
    %509 = vmatpush1.msra.mxu0 0.0
    %510 = vmatprep.subr.mxu0 0.0
    %511 = vmatpush1.msra.mxu0 0.0
    %512 = vmatprep.subr.mxu0 0.0
    %513 = vmatpush1.msra.mxu0 0.0
    %514 = vmatprep.subr.mxu0 0.0
    %515 = vmatpush1.msra.mxu0 0.0
    %516 = vmatprep.subr.mxu0 0.0
    %517 = vmatpush1.msra.mxu0 0.0
    %518 = vmatprep.subr.mxu0 0.0
    %519 = vmatpush1.msra.mxu0 0.0
    %520 = vmatprep.subr.mxu0 0.0
    %521 = vmatpush1.msra.mxu0 0.0
    %522 = vmatprep.subr.mxu0 0.0
    %523 = vmatpush1.msra.mxu0 0.0
    %524 = vmatprep.subr.mxu0 0.0
    %525 = vmatpush1.msra.mxu0 0.0
    %526 = vmatprep.subr.mxu0 0.0
    %527 = vmatpush1.msra.mxu0 0.0
    %528 = vmatprep.subr.mxu0 0.0
    %529 = vmatpush1.msra.mxu0 0.0
    %530 = vmatprep.subr.mxu0 0.0
    %531 = vmatpush1.msra.mxu0 0.0
    %532 = vmatprep.subr.mxu0 0.0
    %533 = vmatpush1.msra.mxu0 0.0
    %534 = vmatprep.subr.mxu0 0.0
    %535 = vmatpush1.msra.mxu0 0.0
    %536 = vmatprep.subr.mxu0 0.0
    %537 = vmatpush1.msra.mxu0 0.0
    %538 = vmatprep.subr.mxu0 0.0
    %539 = vmatpush1.msra.mxu0 0.0
    %540 = vmatprep.subr.mxu0 0.0
    %541 = vmatpush1.msra.mxu0 0.0
    %542 = vmatprep.subr.mxu0 0.0
    %543 = vmatpush1.msra.mxu0 0.0
    %544 = vmatprep.subr.mxu0 0.0
    %545 = vmatpush1.msra.mxu0 0.0
    %546 = vmatprep.subr.mxu0 0.0
    %547 = vmatpush1.msra.mxu0 0.0
    %548 = vmatprep.subr.mxu0 0.0
    %549 = vmatpush1.msra.mxu0 0.0
    %550 = vmatprep.subr.mxu0 0.0
    %551 = vmatpush1.msra.mxu0 0.0
    %552 = vmatprep.subr.mxu0 0.0
    %553 = vmatpush1.msra.mxu0 0.0
    %554 = vmatprep.subr.mxu0 0.0
    %555 = vmatpush1.msra.mxu0 0.0
    %556 = vmatprep.subr.mxu0 0.0
    %557 = vmatpush1.msra.mxu0 0.0
    %558 = vmatprep.mubr.f32.mxu0 0.0
    %559 = vmatmul.mubr.f32.gmra.mrb[0].mxu0 %v492
    %v560 = vpop.f32.mrb[0].mxu0
    %v561 = vadd.f32 0.0, %v560
    %v562 = vpop.f32.mrb[0].mxu0
    %563 = vdwg.mxu0
    %v564 = vadd.f32 %v169, %v561
    %v565 = vtanh.pop %v564
    %v567 = vsel %vm57, %v565, 0
    %569 = vmatprep.subr.mxu0 0.0
    %570 = vmatpush1.msra.mxu0 %v187
    %571 = vmatprep.subr.mxu0 0.0
    %572 = vmatpush1.msra.mxu0 %v188
    %573 = vmatprep.subr.mxu0 0.0
    %574 = vmatpush1.msra.mxu0 %v189
    %575 = vmatprep.subr.mxu0 0.0
    %576 = vmatpush1.msra.mxu0 %v190
    %577 = vmatprep.subr.mxu0 0.0
    %578 = vmatpush1.msra.mxu0 0.0
    %579 = vmatprep.subr.mxu0 0.0
    %580 = vmatpush1.msra.mxu0 0.0
    %581 = vmatprep.subr.mxu0 0.0
    %582 = vmatpush1.msra.mxu0 0.0
    %583 = vmatprep.subr.mxu0 0.0
    %584 = vmatpush1.msra.mxu0 0.0
    %585 = vmatprep.subr.mxu0 0.0
    %586 = vmatpush1.msra.mxu0 0.0
    %587 = vmatprep.subr.mxu0 0.0
    %588 = vmatpush1.msra.mxu0 0.0
    %589 = vmatprep.subr.mxu0 0.0
    %590 = vmatpush1.msra.mxu0 0.0
    %591 = vmatprep.subr.mxu0 0.0
    %592 = vmatpush1.msra.mxu0 0.0
    %593 = vmatprep.subr.mxu0 0.0
    %594 = vmatpush1.msra.mxu0 0.0
    %595 = vmatprep.subr.mxu0 0.0
    %596 = vmatpush1.msra.mxu0 0.0
    %597 = vmatprep.subr.mxu0 0.0
    %598 = vmatpush1.msra.mxu0 0.0
    %599 = vmatprep.subr.mxu0 0.0
    %600 = vmatpush1.msra.mxu0 0.0
    %601 = vmatprep.subr.mxu0 0.0
    %602 = vmatpush1.msra.mxu0 0.0
    %603 = vmatprep.subr.mxu0 0.0
    %604 = vmatpush1.msra.mxu0 0.0
    %605 = vmatprep.subr.mxu0 0.0
    %606 = vmatpush1.msra.mxu0 0.0
    %607 = vmatprep.subr.mxu0 0.0
    %608 = vmatpush1.msra.mxu0 0.0
    %609 = vmatprep.subr.mxu0 0.0
    %610 = vmatpush1.msra.mxu0 0.0
    %611 = vmatprep.subr.mxu0 0.0
    %612 = vmatpush1.msra.mxu0 0.0
    %613 = vmatprep.subr.mxu0 0.0
    %614 = vmatpush1.msra.mxu0 0.0
    %615 = vmatprep.subr.mxu0 0.0
    %616 = vmatpush1.msra.mxu0 0.0
    %617 = vmatprep.subr.mxu0 0.0
    %618 = vmatpush1.msra.mxu0 0.0
    %619 = vmatprep.subr.mxu0 0.0
    %620 = vmatpush1.msra.mxu0 0.0
    %621 = vmatprep.subr.mxu0 0.0
    %622 = vmatpush1.msra.mxu0 0.0
    %623 = vmatprep.subr.mxu0 0.0
    %624 = vmatpush1.msra.mxu0 0.0
    %625 = vmatprep.subr.mxu0 0.0
    %626 = vmatpush1.msra.mxu0 0.0
    %627 = vmatprep.subr.mxu0 0.0
    %628 = vmatpush1.msra.mxu0 0.0
    %629 = vmatprep.subr.mxu0 0.0
    %630 = vmatpush1.msra.mxu0 0.0
    %631 = vmatprep.subr.mxu0 0.0
    %632 = vmatpush1.msra.mxu0 0.0
    %633 = vmatprep.mubr.f32.mxu0 0.0
    %634 = vmatmul.mubr.f32.gmra.mrb[0].mxu0 %v567
    %v635 = vpop.f32.mrb[0].mxu0
    %v636 = vadd.f32 0.0, %v635
    %v637 = vpop.f32.mrb[0].mxu0
    %638 = vdwg.mxu0
    %v639 = vadd.f32 %v174, %v636
    %v640 = vtanh.pop %v639
    %v642 = vsel %vm57, %v640, 0
    %644 = vmatprep.subr.mxu0 0.0
    %645 = vmatpush1.msra.mxu0 %v187
    %646 = vmatprep.subr.mxu0 0.0
    %647 = vmatpush1.msra.mxu0 %v188
    %648 = vmatprep.subr.mxu0 0.0
    %649 = vmatpush1.msra.mxu0 %v189
    %650 = vmatprep.subr.mxu0 0.0
    %651 = vmatpush1.msra.mxu0 %v190
    %652 = vmatprep.subr.mxu0 0.0
    %653 = vmatpush1.msra.mxu0 0.0
    %654 = vmatprep.subr.mxu0 0.0
    %655 = vmatpush1.msra.mxu0 0.0
    %656 = vmatprep.subr.mxu0 0.0
    %657 = vmatpush1.msra.mxu0 0.0
    %658 = vmatprep.subr.mxu0 0.0
    %659 = vmatpush1.msra.mxu0 0.0
    %660 = vmatprep.subr.mxu0 0.0
    %661 = vmatpush1.msra.mxu0 0.0
    %662 = vmatprep.subr.mxu0 0.0
    %663 = vmatpush1.msra.mxu0 0.0
    %664 = vmatprep.subr.mxu0 0.0
    %665 = vmatpush1.msra.mxu0 0.0
    %666 = vmatprep.subr.mxu0 0.0
    %667 = vmatpush1.msra.mxu0 0.0
    %668 = vmatprep.subr.mxu0 0.0
    %669 = vmatpush1.msra.mxu0 0.0
    %670 = vmatprep.subr.mxu0 0.0
    %671 = vmatpush1.msra.mxu0 0.0
    %672 = vmatprep.subr.mxu0 0.0
    %673 = vmatpush1.msra.mxu0 0.0
    %674 = vmatprep.subr.mxu0 0.0
    %675 = vmatpush1.msra.mxu0 0.0
    %676 = vmatprep.subr.mxu0 0.0
    %677 = vmatpush1.msra.mxu0 0.0
    %678 = vmatprep.subr.mxu0 0.0
    %679 = vmatpush1.msra.mxu0 0.0
    %680 = vmatprep.subr.mxu0 0.0
    %681 = vmatpush1.msra.mxu0 0.0
    %682 = vmatprep.subr.mxu0 0.0
    %683 = vmatpush1.msra.mxu0 0.0
    %684 = vmatprep.subr.mxu0 0.0
    %685 = vmatpush1.msra.mxu0 0.0
    %686 = vmatprep.subr.mxu0 0.0
    %687 = vmatpush1.msra.mxu0 0.0
    %688 = vmatprep.subr.mxu0 0.0
    %689 = vmatpush1.msra.mxu0 0.0
    %690 = vmatprep.subr.mxu0 0.0
    %691 = vmatpush1.msra.mxu0 0.0
    %692 = vmatprep.subr.mxu0 0.0
    %693 = vmatpush1.msra.mxu0 0.0
    %694 = vmatprep.subr.mxu0 0.0
    %695 = vmatpush1.msra.mxu0 0.0
    %696 = vmatprep.subr.mxu0 0.0
    %697 = vmatpush1.msra.mxu0 0.0
    %698 = vmatprep.subr.mxu0 0.0
    %699 = vmatpush1.msra.mxu0 0.0
    %700 = vmatprep.subr.mxu0 0.0
    %701 = vmatpush1.msra.mxu0 0.0
    %702 = vmatprep.subr.mxu0 0.0
    %703 = vmatpush1.msra.mxu0 0.0
    %704 = vmatprep.subr.mxu0 0.0
    %705 = vmatpush1.msra.mxu0 0.0
    %706 = vmatprep.subr.mxu0 0.0
    %707 = vmatpush1.msra.mxu0 0.0
    %708 = vmatprep.mubr.f32.mxu0 0.0
    %709 = vmatmul.mubr.f32.gmra.mrb[0].mxu0 %v642
    %v710 = vpop.f32.mrb[0].mxu0
    %v711 = vadd.f32 0.0, %v710
    %v712 = vpop.f32.mrb[0].mxu0
    %713 = vdwg.mxu0
    %v714 = vadd.f32 %v179, %v711
    %v715 = vtanh.pop %v714
    %v717 = vsel %vm57, %v715, 0
    %719 = vmatprep.subr.mxu0 0.0
    %720 = vmatpush1.msra.mxu0 %v187
    %721 = vmatprep.subr.mxu0 0.0
    %722 = vmatpush1.msra.mxu0 %v188
    %723 = vmatprep.subr.mxu0 0.0
    %724 = vmatpush1.msra.mxu0 %v189
    %725 = vmatprep.subr.mxu0 0.0
    %726 = vmatpush1.msra.mxu0 %v190
    %727 = vmatprep.subr.mxu0 0.0
    %728 = vmatpush1.msra.mxu0 0.0
    %729 = vmatprep.subr.mxu0 0.0
    %730 = vmatpush1.msra.mxu0 0.0
    %731 = vmatprep.subr.mxu0 0.0
    %732 = vmatpush1.msra.mxu0 0.0
    %733 = vmatprep.subr.mxu0 0.0
    %734 = vmatpush1.msra.mxu0 0.0
    %735 = vmatprep.subr.mxu0 0.0
    %736 = vmatpush1.msra.mxu0 0.0
    %737 = vmatprep.subr.mxu0 0.0
    %738 = vmatpush1.msra.mxu0 0.0
    %739 = vmatprep.subr.mxu0 0.0
    %740 = vmatpush1.msra.mxu0 0.0
    %741 = vmatprep.subr.mxu0 0.0
    %742 = vmatpush1.msra.mxu0 0.0
    %743 = vmatprep.subr.mxu0 0.0
    %744 = vmatpush1.msra.mxu0 0.0
    %745 = vmatprep.subr.mxu0 0.0
    %746 = vmatpush1.msra.mxu0 0.0
    %747 = vmatprep.subr.mxu0 0.0
    %748 = vmatpush1.msra.mxu0 0.0
    %749 = vmatprep.subr.mxu0 0.0
    %750 = vmatpush1.msra.mxu0 0.0
    %751 = vmatprep.subr.mxu0 0.0
    %752 = vmatpush1.msra.mxu0 0.0
    %753 = vmatprep.subr.mxu0 0.0
    %754 = vmatpush1.msra.mxu0 0.0
    %755 = vmatprep.subr.mxu0 0.0
    %756 = vmatpush1.msra.mxu0 0.0
    %757 = vmatprep.subr.mxu0 0.0
    %758 = vmatpush1.msra.mxu0 0.0
    %759 = vmatprep.subr.mxu0 0.0
    %760 = vmatpush1.msra.mxu0 0.0
    %761 = vmatprep.subr.mxu0 0.0
    %762 = vmatpush1.msra.mxu0 0.0
    %763 = vmatprep.subr.mxu0 0.0
    %764 = vmatpush1.msra.mxu0 0.0
    %765 = vmatprep.subr.mxu0 0.0
    %766 = vmatpush1.msra.mxu0 0.0
    %767 = vmatprep.subr.mxu0 0.0
    %768 = vmatpush1.msra.mxu0 0.0
    %769 = vmatprep.subr.mxu0 0.0
    %770 = vmatpush1.msra.mxu0 0.0
    %771 = vmatprep.subr.mxu0 0.0
    %772 = vmatpush1.msra.mxu0 0.0
    %773 = vmatprep.subr.mxu0 0.0
    %774 = vmatpush1.msra.mxu0 0.0
    %775 = vmatprep.subr.mxu0 0.0
    %776 = vmatpush1.msra.mxu0 0.0
    %777 = vmatprep.subr.mxu0 0.0
    %778 = vmatpush1.msra.mxu0 0.0
    %779 = vmatprep.subr.mxu0 0.0
    %780 = vmatpush1.msra.mxu0 0.0
    %781 = vmatprep.subr.mxu0 0.0
    %782 = vmatpush1.msra.mxu0 0.0
    %783 = vmatprep.mubr.f32.mxu0 0.0
    %784 = vmatmul.mubr.f32.gmra.mrb[0].mxu0 %v717
    %v785 = vpop.f32.mrb[0].mxu0
    %v786 = vadd.f32 0.0, %v785
    %v787 = vpop.f32.mrb[0].mxu0
    %788 = vdwg.mxu0
    %v789 = vadd.f32 %v184, %v786
    %v790 = vtanh.pop %v789
    %s791 = scalar_lea.vmem %s1, 32
    %v792 = vld [vmem:[%s791] sm:$0xff]
    %v793 = vld [vmem:[%s791 + $0x8] sm:$0xff]
    %v794 = vld [vmem:[%s791 + $0x10] sm:$0xff]
    %v795 = vld [vmem:[%s791 + $0x18] sm:$0xff]
    %s796 = scalar_lea.vmem %s3, 1
    %v797 = vld [vmem:[%s796] sm:$0x1]
    %v799 = vlaneseq
    %v800 = vshrl.u32 %v799, 7
    %v801 = vsub.s32 0, %v800
    %v802 = vrot.slane %v797, %v801
    %v805 = vsel %vm57, %v790, 0
    %807 = vmatprep.subr.mxu0 0.0
    %808 = vmatpush1.msra.mxu0 %v792
    %809 = vmatprep.subr.mxu0 0.0
    %810 = vmatpush1.msra.mxu0 %v793
    %811 = vmatprep.subr.mxu0 0.0
    %812 = vmatpush1.msra.mxu0 %v794
    %813 = vmatprep.subr.mxu0 0.0
    %814 = vmatpush1.msra.mxu0 %v795
    %815 = vmatprep.subr.mxu0 0.0
    %816 = vmatpush1.msra.mxu0 0.0
    %817 = vmatprep.subr.mxu0 0.0
    %818 = vmatpush1.msra.mxu0 0.0
    %819 = vmatprep.subr.mxu0 0.0
    %820 = vmatpush1.msra.mxu0 0.0
    %821 = vmatprep.subr.mxu0 0.0
    %822 = vmatpush1.msra.mxu0 0.0
    %823 = vmatprep.subr.mxu0 0.0
    %824 = vmatpush1.msra.mxu0 0.0
    %825 = vmatprep.subr.mxu0 0.0
    %826 = vmatpush1.msra.mxu0 0.0
    %827 = vmatprep.subr.mxu0 0.0
    %828 = vmatpush1.msra.mxu0 0.0
    %829 = vmatprep.subr.mxu0 0.0
    %830 = vmatpush1.msra.mxu0 0.0
    %831 = vmatprep.subr.mxu0 0.0
    %832 = vmatpush1.msra.mxu0 0.0
    %833 = vmatprep.subr.mxu0 0.0
    %834 = vmatpush1.msra.mxu0 0.0
    %835 = vmatprep.subr.mxu0 0.0
    %836 = vmatpush1.msra.mxu0 0.0
    %837 = vmatprep.subr.mxu0 0.0
    %838 = vmatpush1.msra.mxu0 0.0
    %839 = vmatprep.subr.mxu0 0.0
    %840 = vmatpush1.msra.mxu0 0.0
    %841 = vmatprep.subr.mxu0 0.0
    %842 = vmatpush1.msra.mxu0 0.0
    %843 = vmatprep.subr.mxu0 0.0
    %844 = vmatpush1.msra.mxu0 0.0
    %845 = vmatprep.subr.mxu0 0.0
    %846 = vmatpush1.msra.mxu0 0.0
    %847 = vmatprep.subr.mxu0 0.0
    %848 = vmatpush1.msra.mxu0 0.0
    %849 = vmatprep.subr.mxu0 0.0
    %850 = vmatpush1.msra.mxu0 0.0
    %851 = vmatprep.subr.mxu0 0.0
    %852 = vmatpush1.msra.mxu0 0.0
    %853 = vmatprep.subr.mxu0 0.0
    %854 = vmatpush1.msra.mxu0 0.0
    %855 = vmatprep.subr.mxu0 0.0
    %856 = vmatpush1.msra.mxu0 0.0
    %857 = vmatprep.subr.mxu0 0.0
    %858 = vmatpush1.msra.mxu0 0.0
    %859 = vmatprep.subr.mxu0 0.0
    %860 = vmatpush1.msra.mxu0 0.0
    %861 = vmatprep.subr.mxu0 0.0
    %862 = vmatpush1.msra.mxu0 0.0
    %863 = vmatprep.subr.mxu0 0.0
    %864 = vmatpush1.msra.mxu0 0.0
    %865 = vmatprep.subr.mxu0 0.0
    %866 = vmatpush1.msra.mxu0 0.0
    %867 = vmatprep.subr.mxu0 0.0
    %868 = vmatpush1.msra.mxu0 0.0
    %869 = vmatprep.subr.mxu0 0.0
    %870 = vmatpush1.msra.mxu0 0.0
    %871 = vmatprep.mubr.f32.mxu0 0.0
    %872 = vmatmul.mubr.f32.gmra.mrb[0].mxu0 %v267
    %v873 = vpop.f32.mrb[0].mxu0
    %v874 = vadd.f32 %v802, %v873
    %v875 = vpop.f32.mrb[0].mxu0
    %876 = vmatprep.mubr.f32.mxu0 0.0
    %877 = vmatmul.mubr.f32.gmra.mrb[0].mxu0 %v342
    %v878 = vpop.f32.mrb[0].mxu0
    %v879 = vadd.f32 %v802, %v878
    %v880 = vpop.f32.mrb[0].mxu0
    %881 = vmatprep.mubr.f32.mxu0 0.0
    %882 = vmatmul.mubr.f32.gmra.mrb[0].mxu0 %v417
    %v883 = vpop.f32.mrb[0].mxu0
    %v884 = vadd.f32 %v802, %v883
    %v885 = vpop.f32.mrb[0].mxu0
    %886 = vmatprep.mubr.f32.mxu0 0.0
    %887 = vmatmul.mubr.f32.gmra.mrb[0].mxu0 %v492
    %v888 = vpop.f32.mrb[0].mxu0
    %v889 = vadd.f32 %v802, %v888
    %v890 = vpop.f32.mrb[0].mxu0
    %891 = vmatprep.mubr.f32.mxu0 0.0
    %892 = vmatmul.mubr.f32.gmra.mrb[0].mxu0 %v567
    %v893 = vpop.f32.mrb[0].mxu0
    %v894 = vadd.f32 %v802, %v893
    %v895 = vpop.f32.mrb[0].mxu0
    %896 = vmatprep.mubr.f32.mxu0 0.0
    %897 = vmatmul.mubr.f32.gmra.mrb[0].mxu0 %v642
    %v898 = vpop.f32.mrb[0].mxu0
    %v899 = vadd.f32 %v802, %v898
    %v900 = vpop.f32.mrb[0].mxu0
    %901 = vmatprep.mubr.f32.mxu0 0.0
    %902 = vmatmul.mubr.f32.gmra.mrb[0].mxu0 %v717
    %v903 = vpop.f32.mrb[0].mxu0
    %v904 = vadd.f32 %v802, %v903
    %v905 = vpop.f32.mrb[0].mxu0
    %906 = vmatprep.mubr.f32.mxu0 0.0
    %907 = vmatmul.mubr.f32.gmra.mrb[0].mxu0 %v805
    %v908 = vpop.f32.mrb[0].mxu0
    %v909 = vadd.f32 %v802, %v908
    %v910 = vpop.f32.mrb[0].mxu0
    %911 = vdwg.mxu0
    %s912 = scalar_lea.vmem [#allocation2], 32
    %v913 = vld [vmem:[%s912] sm:$0xff]
    %v914 = vld [vmem:[%s912 + $0x8] sm:$0xff]
    %v915 = vld [vmem:[%s912 + $0x10] sm:$0xff]
    %v916 = vld [vmem:[%s912 + $0x18] sm:$0xff]
    %917 = vmatprep.subr.mxu0 0.0
    %918 = vmatpush1.msra.mxu0 %v913
    %919 = vmatprep.subr.mxu0 0.0
    %920 = vmatpush1.msra.mxu0 %v914
    %921 = vmatprep.subr.mxu0 0.0
    %922 = vmatpush1.msra.mxu0 %v915
    %923 = vmatprep.subr.mxu0 0.0
    %924 = vmatpush1.msra.mxu0 %v916
    %925 = vmatprep.subr.mxu0 0.0
    %926 = vmatpush1.msra.mxu0 0.0
    %927 = vmatprep.subr.mxu0 0.0
    %928 = vmatpush1.msra.mxu0 0.0
    %929 = vmatprep.subr.mxu0 0.0
    %930 = vmatpush1.msra.mxu0 0.0
    %931 = vmatprep.subr.mxu0 0.0
    %932 = vmatpush1.msra.mxu0 0.0
    %933 = vmatprep.subr.mxu0 0.0
    %934 = vmatpush1.msra.mxu0 0.0
    %935 = vmatprep.subr.mxu0 0.0
    %936 = vmatpush1.msra.mxu0 0.0
    %937 = vmatprep.subr.mxu0 0.0
    %938 = vmatpush1.msra.mxu0 0.0
    %939 = vmatprep.subr.mxu0 0.0
    %940 = vmatpush1.msra.mxu0 0.0
    %941 = vmatprep.subr.mxu0 0.0
    %942 = vmatpush1.msra.mxu0 0.0
    %943 = vmatprep.subr.mxu0 0.0
    %944 = vmatpush1.msra.mxu0 0.0
    %945 = vmatprep.subr.mxu0 0.0
    %946 = vmatpush1.msra.mxu0 0.0
    %947 = vmatprep.subr.mxu0 0.0
    %948 = vmatpush1.msra.mxu0 0.0
    %949 = vmatprep.subr.mxu0 0.0
    %950 = vmatpush1.msra.mxu0 0.0
    %951 = vmatprep.subr.mxu0 0.0
    %952 = vmatpush1.msra.mxu0 0.0
    %953 = vmatprep.subr.mxu0 0.0
    %954 = vmatpush1.msra.mxu0 0.0
    %955 = vmatprep.subr.mxu0 0.0
    %956 = vmatpush1.msra.mxu0 0.0
    %957 = vmatprep.subr.mxu0 0.0
    %958 = vmatpush1.msra.mxu0 0.0
    %959 = vmatprep.subr.mxu0 0.0
    %960 = vmatpush1.msra.mxu0 0.0
    %961 = vmatprep.subr.mxu0 0.0
    %962 = vmatpush1.msra.mxu0 0.0
    %963 = vmatprep.subr.mxu0 0.0
    %964 = vmatpush1.msra.mxu0 0.0
    %965 = vmatprep.subr.mxu0 0.0
    %966 = vmatpush1.msra.mxu0 0.0
    %967 = vmatprep.subr.mxu0 0.0
    %968 = vmatpush1.msra.mxu0 0.0
    %969 = vmatprep.subr.mxu0 0.0
    %970 = vmatpush1.msra.mxu0 0.0
    %971 = vmatprep.subr.mxu0 0.0
    %972 = vmatpush1.msra.mxu0 0.0
    %973 = vmatprep.subr.mxu0 0.0
    %974 = vmatpush1.msra.mxu0 0.0
    %975 = vmatprep.subr.mxu0 0.0
    %976 = vmatpush1.msra.mxu0 0.0
    %977 = vmatprep.subr.mxu0 0.0
    %978 = vmatpush1.msra.mxu0 0.0
    %979 = vmatprep.subr.mxu0 0.0
    %980 = vmatpush1.msra.mxu0 0.0
    %981 = vmatprep.mubr.f32.mxu0 0.0
    %982 = vmatmul.mubr.f32.gmra.mrb[0].mxu0 %v192
    %v983 = vpop.f32.mrb[0].mxu0
    %v984 = vadd.f32 0.0, %v983
    %v985 = vpop.f32.mrb[0].mxu0
    %986 = vdwg.mxu0
    %v987 = vadd.f32 %v874, %v984
    %v988 = vtanh.pop %v987
    %v990 = vsel %vm57, %v988, 0
    %992 = vmatprep.subr.mxu0 0.0
    %993 = vmatpush1.msra.mxu0 %v913
    %994 = vmatprep.subr.mxu0 0.0
    %995 = vmatpush1.msra.mxu0 %v914
    %996 = vmatprep.subr.mxu0 0.0
    %997 = vmatpush1.msra.mxu0 %v915
    %998 = vmatprep.subr.mxu0 0.0
    %999 = vmatpush1.msra.mxu0 %v916
    %1000 = vmatprep.subr.mxu0 0.0
    %1001 = vmatpush1.msra.mxu0 0.0
    %1002 = vmatprep.subr.mxu0 0.0
    %1003 = vmatpush1.msra.mxu0 0.0
    %1004 = vmatprep.subr.mxu0 0.0
    %1005 = vmatpush1.msra.mxu0 0.0
    %1006 = vmatprep.subr.mxu0 0.0
    %1007 = vmatpush1.msra.mxu0 0.0
    %1008 = vmatprep.subr.mxu0 0.0
    %1009 = vmatpush1.msra.mxu0 0.0
    %1010 = vmatprep.subr.mxu0 0.0
    %1011 = vmatpush1.msra.mxu0 0.0
    %1012 = vmatprep.subr.mxu0 0.0
    %1013 = vmatpush1.msra.mxu0 0.0
    %1014 = vmatprep.subr.mxu0 0.0
    %1015 = vmatpush1.msra.mxu0 0.0
    %1016 = vmatprep.subr.mxu0 0.0
    %1017 = vmatpush1.msra.mxu0 0.0
    %1018 = vmatprep.subr.mxu0 0.0
    %1019 = vmatpush1.msra.mxu0 0.0
    %1020 = vmatprep.subr.mxu0 0.0
    %1021 = vmatpush1.msra.mxu0 0.0
    %1022 = vmatprep.subr.mxu0 0.0
    %1023 = vmatpush1.msra.mxu0 0.0
    %1024 = vmatprep.subr.mxu0 0.0
    %1025 = vmatpush1.msra.mxu0 0.0
    %1026 = vmatprep.subr.mxu0 0.0
    %1027 = vmatpush1.msra.mxu0 0.0
    %1028 = vmatprep.subr.mxu0 0.0
    %1029 = vmatpush1.msra.mxu0 0.0
    %1030 = vmatprep.subr.mxu0 0.0
    %1031 = vmatpush1.msra.mxu0 0.0
    %1032 = vmatprep.subr.mxu0 0.0
    %1033 = vmatpush1.msra.mxu0 0.0
    %1034 = vmatprep.subr.mxu0 0.0
    %1035 = vmatpush1.msra.mxu0 0.0
    %1036 = vmatprep.subr.mxu0 0.0
    %1037 = vmatpush1.msra.mxu0 0.0
    %1038 = vmatprep.subr.mxu0 0.0
    %1039 = vmatpush1.msra.mxu0 0.0
    %1040 = vmatprep.subr.mxu0 0.0
    %1041 = vmatpush1.msra.mxu0 0.0
    %1042 = vmatprep.subr.mxu0 0.0
    %1043 = vmatpush1.msra.mxu0 0.0
    %1044 = vmatprep.subr.mxu0 0.0
    %1045 = vmatpush1.msra.mxu0 0.0
    %1046 = vmatprep.subr.mxu0 0.0
    %1047 = vmatpush1.msra.mxu0 0.0
    %1048 = vmatprep.subr.mxu0 0.0
    %1049 = vmatpush1.msra.mxu0 0.0
    %1050 = vmatprep.subr.mxu0 0.0
    %1051 = vmatpush1.msra.mxu0 0.0
    %1052 = vmatprep.subr.mxu0 0.0
    %1053 = vmatpush1.msra.mxu0 0.0
    %1054 = vmatprep.subr.mxu0 0.0
    %1055 = vmatpush1.msra.mxu0 0.0
    %1056 = vmatprep.mubr.f32.mxu0 0.0
    %1057 = vmatmul.mubr.f32.gmra.mrb[0].mxu0 %v990
    %v1058 = vpop.f32.mrb[0].mxu0
    %v1059 = vadd.f32 0.0, %v1058
    %v1060 = vpop.f32.mrb[0].mxu0
    %1061 = vdwg.mxu0
    %v1062 = vadd.f32 %v879, %v1059
    %v1063 = vtanh.pop %v1062
    %v1065 = vsel %vm57, %v1063, 0
    %1067 = vmatprep.subr.mxu0 0.0
    %1068 = vmatpush1.msra.mxu0 %v913
    %1069 = vmatprep.subr.mxu0 0.0
    %1070 = vmatpush1.msra.mxu0 %v914
    %1071 = vmatprep.subr.mxu0 0.0
    %1072 = vmatpush1.msra.mxu0 %v915
    %1073 = vmatprep.subr.mxu0 0.0
    %1074 = vmatpush1.msra.mxu0 %v916
    %1075 = vmatprep.subr.mxu0 0.0
    %1076 = vmatpush1.msra.mxu0 0.0
    %1077 = vmatprep.subr.mxu0 0.0
    %1078 = vmatpush1.msra.mxu0 0.0
    %1079 = vmatprep.subr.mxu0 0.0
    %1080 = vmatpush1.msra.mxu0 0.0
    %1081 = vmatprep.subr.mxu0 0.0
    %1082 = vmatpush1.msra.mxu0 0.0
    %1083 = vmatprep.subr.mxu0 0.0
    %1084 = vmatpush1.msra.mxu0 0.0
    %1085 = vmatprep.subr.mxu0 0.0
    %1086 = vmatpush1.msra.mxu0 0.0
    %1087 = vmatprep.subr.mxu0 0.0
    %1088 = vmatpush1.msra.mxu0 0.0
    %1089 = vmatprep.subr.mxu0 0.0
    %1090 = vmatpush1.msra.mxu0 0.0
    %1091 = vmatprep.subr.mxu0 0.0
    %1092 = vmatpush1.msra.mxu0 0.0
    %1093 = vmatprep.subr.mxu0 0.0
    %1094 = vmatpush1.msra.mxu0 0.0
    %1095 = vmatprep.subr.mxu0 0.0
    %1096 = vmatpush1.msra.mxu0 0.0
    %1097 = vmatprep.subr.mxu0 0.0
    %1098 = vmatpush1.msra.mxu0 0.0
    %1099 = vmatprep.subr.mxu0 0.0
    %1100 = vmatpush1.msra.mxu0 0.0
    %1101 = vmatprep.subr.mxu0 0.0
    %1102 = vmatpush1.msra.mxu0 0.0
    %1103 = vmatprep.subr.mxu0 0.0
    %1104 = vmatpush1.msra.mxu0 0.0
    %1105 = vmatprep.subr.mxu0 0.0
    %1106 = vmatpush1.msra.mxu0 0.0
    %1107 = vmatprep.subr.mxu0 0.0
    %1108 = vmatpush1.msra.mxu0 0.0
    %1109 = vmatprep.subr.mxu0 0.0
    %1110 = vmatpush1.msra.mxu0 0.0
    %1111 = vmatprep.subr.mxu0 0.0
    %1112 = vmatpush1.msra.mxu0 0.0
    %1113 = vmatprep.subr.mxu0 0.0
    %1114 = vmatpush1.msra.mxu0 0.0
    %1115 = vmatprep.subr.mxu0 0.0
    %1116 = vmatpush1.msra.mxu0 0.0
    %1117 = vmatprep.subr.mxu0 0.0
    %1118 = vmatpush1.msra.mxu0 0.0
    %1119 = vmatprep.subr.mxu0 0.0
    %1120 = vmatpush1.msra.mxu0 0.0
    %1121 = vmatprep.subr.mxu0 0.0
    %1122 = vmatpush1.msra.mxu0 0.0
    %1123 = vmatprep.subr.mxu0 0.0
    %1124 = vmatpush1.msra.mxu0 0.0
    %1125 = vmatprep.subr.mxu0 0.0
    %1126 = vmatpush1.msra.mxu0 0.0
    %1127 = vmatprep.subr.mxu0 0.0
    %1128 = vmatpush1.msra.mxu0 0.0
    %1129 = vmatprep.subr.mxu0 0.0
    %1130 = vmatpush1.msra.mxu0 0.0
    %1131 = vmatprep.mubr.f32.mxu0 0.0
    %1132 = vmatmul.mubr.f32.gmra.mrb[0].mxu0 %v1065
    %v1133 = vpop.f32.mrb[0].mxu0
    %v1134 = vadd.f32 0.0, %v1133
    %v1135 = vpop.f32.mrb[0].mxu0
    %1136 = vdwg.mxu0
    %v1137 = vadd.f32 %v884, %v1134
    %v1138 = vtanh.pop %v1137
    %v1140 = vsel %vm57, %v1138, 0
    %1142 = vmatprep.subr.mxu0 0.0
    %1143 = vmatpush1.msra.mxu0 %v913
    %1144 = vmatprep.subr.mxu0 0.0
    %1145 = vmatpush1.msra.mxu0 %v914
    %1146 = vmatprep.subr.mxu0 0.0
    %1147 = vmatpush1.msra.mxu0 %v915
    %1148 = vmatprep.subr.mxu0 0.0
    %1149 = vmatpush1.msra.mxu0 %v916
    %1150 = vmatprep.subr.mxu0 0.0
    %1151 = vmatpush1.msra.mxu0 0.0
    %1152 = vmatprep.subr.mxu0 0.0
    %1153 = vmatpush1.msra.mxu0 0.0
    %1154 = vmatprep.subr.mxu0 0.0
    %1155 = vmatpush1.msra.mxu0 0.0
    %1156 = vmatprep.subr.mxu0 0.0
    %1157 = vmatpush1.msra.mxu0 0.0
    %1158 = vmatprep.subr.mxu0 0.0
    %1159 = vmatpush1.msra.mxu0 0.0
    %1160 = vmatprep.subr.mxu0 0.0
    %1161 = vmatpush1.msra.mxu0 0.0
    %1162 = vmatprep.subr.mxu0 0.0
    %1163 = vmatpush1.msra.mxu0 0.0
    %1164 = vmatprep.subr.mxu0 0.0
    %1165 = vmatpush1.msra.mxu0 0.0
    %1166 = vmatprep.subr.mxu0 0.0
    %1167 = vmatpush1.msra.mxu0 0.0
    %1168 = vmatprep.subr.mxu0 0.0
    %1169 = vmatpush1.msra.mxu0 0.0
    %1170 = vmatprep.subr.mxu0 0.0
    %1171 = vmatpush1.msra.mxu0 0.0
    %1172 = vmatprep.subr.mxu0 0.0
    %1173 = vmatpush1.msra.mxu0 0.0
    %1174 = vmatprep.subr.mxu0 0.0
    %1175 = vmatpush1.msra.mxu0 0.0
    %1176 = vmatprep.subr.mxu0 0.0
    %1177 = vmatpush1.msra.mxu0 0.0
    %1178 = vmatprep.subr.mxu0 0.0
    %1179 = vmatpush1.msra.mxu0 0.0
    %1180 = vmatprep.subr.mxu0 0.0
    %1181 = vmatpush1.msra.mxu0 0.0
    %1182 = vmatprep.subr.mxu0 0.0
    %1183 = vmatpush1.msra.mxu0 0.0
    %1184 = vmatprep.subr.mxu0 0.0
    %1185 = vmatpush1.msra.mxu0 0.0
    %1186 = vmatprep.subr.mxu0 0.0
    %1187 = vmatpush1.msra.mxu0 0.0
    %1188 = vmatprep.subr.mxu0 0.0
    %1189 = vmatpush1.msra.mxu0 0.0
    %1190 = vmatprep.subr.mxu0 0.0
    %1191 = vmatpush1.msra.mxu0 0.0
    %1192 = vmatprep.subr.mxu0 0.0
    %1193 = vmatpush1.msra.mxu0 0.0
    %1194 = vmatprep.subr.mxu0 0.0
    %1195 = vmatpush1.msra.mxu0 0.0
    %1196 = vmatprep.subr.mxu0 0.0
    %1197 = vmatpush1.msra.mxu0 0.0
    %1198 = vmatprep.subr.mxu0 0.0
    %1199 = vmatpush1.msra.mxu0 0.0
    %1200 = vmatprep.subr.mxu0 0.0
    %1201 = vmatpush1.msra.mxu0 0.0
    %1202 = vmatprep.subr.mxu0 0.0
    %1203 = vmatpush1.msra.mxu0 0.0
    %1204 = vmatprep.subr.mxu0 0.0
    %1205 = vmatpush1.msra.mxu0 0.0
    %1206 = vmatprep.mubr.f32.mxu0 0.0
    %1207 = vmatmul.mubr.f32.gmra.mrb[0].mxu0 %v1140
    %v1208 = vpop.f32.mrb[0].mxu0
    %v1209 = vadd.f32 0.0, %v1208
    %v1210 = vpop.f32.mrb[0].mxu0
    %1211 = vdwg.mxu0
    %v1212 = vadd.f32 %v889, %v1209
    %v1213 = vtanh.pop %v1212
    %v1215 = vsel %vm57, %v1213, 0
    %1217 = vmatprep.subr.mxu0 0.0
    %1218 = vmatpush1.msra.mxu0 %v913
    %1219 = vmatprep.subr.mxu0 0.0
    %1220 = vmatpush1.msra.mxu0 %v914
    %1221 = vmatprep.subr.mxu0 0.0
    %1222 = vmatpush1.msra.mxu0 %v915
    %1223 = vmatprep.subr.mxu0 0.0
    %1224 = vmatpush1.msra.mxu0 %v916
    %1225 = vmatprep.subr.mxu0 0.0
    %1226 = vmatpush1.msra.mxu0 0.0
    %1227 = vmatprep.subr.mxu0 0.0
    %1228 = vmatpush1.msra.mxu0 0.0
    %1229 = vmatprep.subr.mxu0 0.0
    %1230 = vmatpush1.msra.mxu0 0.0
    %1231 = vmatprep.subr.mxu0 0.0
    %1232 = vmatpush1.msra.mxu0 0.0
    %1233 = vmatprep.subr.mxu0 0.0
    %1234 = vmatpush1.msra.mxu0 0.0
    %1235 = vmatprep.subr.mxu0 0.0
    %1236 = vmatpush1.msra.mxu0 0.0
    %1237 = vmatprep.subr.mxu0 0.0
    %1238 = vmatpush1.msra.mxu0 0.0
    %1239 = vmatprep.subr.mxu0 0.0
    %1240 = vmatpush1.msra.mxu0 0.0
    %1241 = vmatprep.subr.mxu0 0.0
    %1242 = vmatpush1.msra.mxu0 0.0
    %1243 = vmatprep.subr.mxu0 0.0
    %1244 = vmatpush1.msra.mxu0 0.0
    %1245 = vmatprep.subr.mxu0 0.0
    %1246 = vmatpush1.msra.mxu0 0.0
    %1247 = vmatprep.subr.mxu0 0.0
    %1248 = vmatpush1.msra.mxu0 0.0
    %1249 = vmatprep.subr.mxu0 0.0
    %1250 = vmatpush1.msra.mxu0 0.0
    %1251 = vmatprep.subr.mxu0 0.0
    %1252 = vmatpush1.msra.mxu0 0.0
    %1253 = vmatprep.subr.mxu0 0.0
    %1254 = vmatpush1.msra.mxu0 0.0
    %1255 = vmatprep.subr.mxu0 0.0
    %1256 = vmatpush1.msra.mxu0 0.0
    %1257 = vmatprep.subr.mxu0 0.0
    %1258 = vmatpush1.msra.mxu0 0.0
    %1259 = vmatprep.subr.mxu0 0.0
    %1260 = vmatpush1.msra.mxu0 0.0
    %1261 = vmatprep.subr.mxu0 0.0
    %1262 = vmatpush1.msra.mxu0 0.0
    %1263 = vmatprep.subr.mxu0 0.0
    %1264 = vmatpush1.msra.mxu0 0.0
    %1265 = vmatprep.subr.mxu0 0.0
    %1266 = vmatpush1.msra.mxu0 0.0
    %1267 = vmatprep.subr.mxu0 0.0
    %1268 = vmatpush1.msra.mxu0 0.0
    %1269 = vmatprep.subr.mxu0 0.0
    %1270 = vmatpush1.msra.mxu0 0.0
    %1271 = vmatprep.subr.mxu0 0.0
    %1272 = vmatpush1.msra.mxu0 0.0
    %1273 = vmatprep.subr.mxu0 0.0
    %1274 = vmatpush1.msra.mxu0 0.0
    %1275 = vmatprep.subr.mxu0 0.0
    %1276 = vmatpush1.msra.mxu0 0.0
    %1277 = vmatprep.subr.mxu0 0.0
    %1278 = vmatpush1.msra.mxu0 0.0
    %1279 = vmatprep.subr.mxu0 0.0
    %1280 = vmatpush1.msra.mxu0 0.0
    %1281 = vmatprep.mubr.f32.mxu0 0.0
    %1282 = vmatmul.mubr.f32.gmra.mrb[0].mxu0 %v1215
    %v1283 = vpop.f32.mrb[0].mxu0
    %v1284 = vadd.f32 0.0, %v1283
    %v1285 = vpop.f32.mrb[0].mxu0
    %1286 = vdwg.mxu0
    %v1287 = vadd.f32 %v894, %v1284
    %v1288 = vtanh.pop %v1287
    %v1290 = vsel %vm57, %v1288, 0
    %1292 = vmatprep.subr.mxu0 0.0
    %1293 = vmatpush1.msra.mxu0 %v913
    %1294 = vmatprep.subr.mxu0 0.0
    %1295 = vmatpush1.msra.mxu0 %v914
    %1296 = vmatprep.subr.mxu0 0.0
    %1297 = vmatpush1.msra.mxu0 %v915
    %1298 = vmatprep.subr.mxu0 0.0
    %1299 = vmatpush1.msra.mxu0 %v916
    %1300 = vmatprep.subr.mxu0 0.0
    %1301 = vmatpush1.msra.mxu0 0.0
    %1302 = vmatprep.subr.mxu0 0.0
    %1303 = vmatpush1.msra.mxu0 0.0
    %1304 = vmatprep.subr.mxu0 0.0
    %1305 = vmatpush1.msra.mxu0 0.0
    %1306 = vmatprep.subr.mxu0 0.0
    %1307 = vmatpush1.msra.mxu0 0.0
    %1308 = vmatprep.subr.mxu0 0.0
    %1309 = vmatpush1.msra.mxu0 0.0
    %1310 = vmatprep.subr.mxu0 0.0
    %1311 = vmatpush1.msra.mxu0 0.0
    %1312 = vmatprep.subr.mxu0 0.0
    %1313 = vmatpush1.msra.mxu0 0.0
    %1314 = vmatprep.subr.mxu0 0.0
    %1315 = vmatpush1.msra.mxu0 0.0
    %1316 = vmatprep.subr.mxu0 0.0
    %1317 = vmatpush1.msra.mxu0 0.0
    %1318 = vmatprep.subr.mxu0 0.0
    %1319 = vmatpush1.msra.mxu0 0.0
    %1320 = vmatprep.subr.mxu0 0.0
    %1321 = vmatpush1.msra.mxu0 0.0
    %1322 = vmatprep.subr.mxu0 0.0
    %1323 = vmatpush1.msra.mxu0 0.0
    %1324 = vmatprep.subr.mxu0 0.0
    %1325 = vmatpush1.msra.mxu0 0.0
    %1326 = vmatprep.subr.mxu0 0.0
    %1327 = vmatpush1.msra.mxu0 0.0
    %1328 = vmatprep.subr.mxu0 0.0
    %1329 = vmatpush1.msra.mxu0 0.0
    %1330 = vmatprep.subr.mxu0 0.0
    %1331 = vmatpush1.msra.mxu0 0.0
    %1332 = vmatprep.subr.mxu0 0.0
    %1333 = vmatpush1.msra.mxu0 0.0
    %1334 = vmatprep.subr.mxu0 0.0
    %1335 = vmatpush1.msra.mxu0 0.0
    %1336 = vmatprep.subr.mxu0 0.0
    %1337 = vmatpush1.msra.mxu0 0.0
    %1338 = vmatprep.subr.mxu0 0.0
    %1339 = vmatpush1.msra.mxu0 0.0
    %1340 = vmatprep.subr.mxu0 0.0
    %1341 = vmatpush1.msra.mxu0 0.0
    %1342 = vmatprep.subr.mxu0 0.0
    %1343 = vmatpush1.msra.mxu0 0.0
    %1344 = vmatprep.subr.mxu0 0.0
    %1345 = vmatpush1.msra.mxu0 0.0
    %1346 = vmatprep.subr.mxu0 0.0
    %1347 = vmatpush1.msra.mxu0 0.0
    %1348 = vmatprep.subr.mxu0 0.0
    %1349 = vmatpush1.msra.mxu0 0.0
    %1350 = vmatprep.subr.mxu0 0.0
    %1351 = vmatpush1.msra.mxu0 0.0
    %1352 = vmatprep.subr.mxu0 0.0
    %1353 = vmatpush1.msra.mxu0 0.0
    %1354 = vmatprep.subr.mxu0 0.0
    %1355 = vmatpush1.msra.mxu0 0.0
    %1356 = vmatprep.mubr.f32.mxu0 0.0
    %1357 = vmatmul.mubr.f32.gmra.mrb[0].mxu0 %v1290
    %v1358 = vpop.f32.mrb[0].mxu0
    %v1359 = vadd.f32 0.0, %v1358
    %v1360 = vpop.f32.mrb[0].mxu0
    %1361 = vdwg.mxu0
    %v1362 = vadd.f32 %v899, %v1359
    %v1363 = vtanh.pop %v1362
    %v1365 = vsel %vm57, %v1363, 0
    %1367 = vmatprep.subr.mxu0 0.0
    %1368 = vmatpush1.msra.mxu0 %v913
    %1369 = vmatprep.subr.mxu0 0.0
    %1370 = vmatpush1.msra.mxu0 %v914
    %1371 = vmatprep.subr.mxu0 0.0
    %1372 = vmatpush1.msra.mxu0 %v915
    %1373 = vmatprep.subr.mxu0 0.0
    %1374 = vmatpush1.msra.mxu0 %v916
    %1375 = vmatprep.subr.mxu0 0.0
    %1376 = vmatpush1.msra.mxu0 0.0
    %1377 = vmatprep.subr.mxu0 0.0
    %1378 = vmatpush1.msra.mxu0 0.0
    %1379 = vmatprep.subr.mxu0 0.0
    %1380 = vmatpush1.msra.mxu0 0.0
    %1381 = vmatprep.subr.mxu0 0.0
    %1382 = vmatpush1.msra.mxu0 0.0
    %1383 = vmatprep.subr.mxu0 0.0
    %1384 = vmatpush1.msra.mxu0 0.0
    %1385 = vmatprep.subr.mxu0 0.0
    %1386 = vmatpush1.msra.mxu0 0.0
    %1387 = vmatprep.subr.mxu0 0.0
    %1388 = vmatpush1.msra.mxu0 0.0
    %1389 = vmatprep.subr.mxu0 0.0
    %1390 = vmatpush1.msra.mxu0 0.0
    %1391 = vmatprep.subr.mxu0 0.0
    %1392 = vmatpush1.msra.mxu0 0.0
    %1393 = vmatprep.subr.mxu0 0.0
    %1394 = vmatpush1.msra.mxu0 0.0
    %1395 = vmatprep.subr.mxu0 0.0
    %1396 = vmatpush1.msra.mxu0 0.0
    %1397 = vmatprep.subr.mxu0 0.0
    %1398 = vmatpush1.msra.mxu0 0.0
    %1399 = vmatprep.subr.mxu0 0.0
    %1400 = vmatpush1.msra.mxu0 0.0
    %1401 = vmatprep.subr.mxu0 0.0
    %1402 = vmatpush1.msra.mxu0 0.0
    %1403 = vmatprep.subr.mxu0 0.0
    %1404 = vmatpush1.msra.mxu0 0.0
    %1405 = vmatprep.subr.mxu0 0.0
    %1406 = vmatpush1.msra.mxu0 0.0
    %1407 = vmatprep.subr.mxu0 0.0
    %1408 = vmatpush1.msra.mxu0 0.0
    %1409 = vmatprep.subr.mxu0 0.0
    %1410 = vmatpush1.msra.mxu0 0.0
    %1411 = vmatprep.subr.mxu0 0.0
    %1412 = vmatpush1.msra.mxu0 0.0
    %1413 = vmatprep.subr.mxu0 0.0
    %1414 = vmatpush1.msra.mxu0 0.0
    %1415 = vmatprep.subr.mxu0 0.0
    %1416 = vmatpush1.msra.mxu0 0.0
    %1417 = vmatprep.subr.mxu0 0.0
    %1418 = vmatpush1.msra.mxu0 0.0
    %1419 = vmatprep.subr.mxu0 0.0
    %1420 = vmatpush1.msra.mxu0 0.0
    %1421 = vmatprep.subr.mxu0 0.0
    %1422 = vmatpush1.msra.mxu0 0.0
    %1423 = vmatprep.subr.mxu0 0.0
    %1424 = vmatpush1.msra.mxu0 0.0
    %1425 = vmatprep.subr.mxu0 0.0
    %1426 = vmatpush1.msra.mxu0 0.0
    %1427 = vmatprep.subr.mxu0 0.0
    %1428 = vmatpush1.msra.mxu0 0.0
    %1429 = vmatprep.subr.mxu0 0.0
    %1430 = vmatpush1.msra.mxu0 0.0
    %1431 = vmatprep.mubr.f32.mxu0 0.0
    %1432 = vmatmul.mubr.f32.gmra.mrb[0].mxu0 %v1365
    %v1433 = vpop.f32.mrb[0].mxu0
    %v1434 = vadd.f32 0.0, %v1433
    %v1435 = vpop.f32.mrb[0].mxu0
    %1436 = vdwg.mxu0
    %v1437 = vadd.f32 %v904, %v1434
    %v1438 = vtanh.pop %v1437
    %v1440 = vsel %vm57, %v1438, 0
    %1442 = vmatprep.subr.mxu0 0.0
    %1443 = vmatpush1.msra.mxu0 %v913
    %1444 = vmatprep.subr.mxu0 0.0
    %1445 = vmatpush1.msra.mxu0 %v914
    %1446 = vmatprep.subr.mxu0 0.0
    %1447 = vmatpush1.msra.mxu0 %v915
    %1448 = vmatprep.subr.mxu0 0.0
    %1449 = vmatpush1.msra.mxu0 %v916
    %1450 = vmatprep.subr.mxu0 0.0
    %1451 = vmatpush1.msra.mxu0 0.0
    %1452 = vmatprep.subr.mxu0 0.0
    %1453 = vmatpush1.msra.mxu0 0.0
    %1454 = vmatprep.subr.mxu0 0.0
    %1455 = vmatpush1.msra.mxu0 0.0
    %1456 = vmatprep.subr.mxu0 0.0
    %1457 = vmatpush1.msra.mxu0 0.0
    %1458 = vmatprep.subr.mxu0 0.0
    %1459 = vmatpush1.msra.mxu0 0.0
    %1460 = vmatprep.subr.mxu0 0.0
    %1461 = vmatpush1.msra.mxu0 0.0
    %1462 = vmatprep.subr.mxu0 0.0
    %1463 = vmatpush1.msra.mxu0 0.0
    %1464 = vmatprep.subr.mxu0 0.0
    %1465 = vmatpush1.msra.mxu0 0.0
    %1466 = vmatprep.subr.mxu0 0.0
    %1467 = vmatpush1.msra.mxu0 0.0
    %1468 = vmatprep.subr.mxu0 0.0
    %1469 = vmatpush1.msra.mxu0 0.0
    %1470 = vmatprep.subr.mxu0 0.0
    %1471 = vmatpush1.msra.mxu0 0.0
    %1472 = vmatprep.subr.mxu0 0.0
    %1473 = vmatpush1.msra.mxu0 0.0
    %1474 = vmatprep.subr.mxu0 0.0
    %1475 = vmatpush1.msra.mxu0 0.0
    %1476 = vmatprep.subr.mxu0 0.0
    %1477 = vmatpush1.msra.mxu0 0.0
    %1478 = vmatprep.subr.mxu0 0.0
    %1479 = vmatpush1.msra.mxu0 0.0
    %1480 = vmatprep.subr.mxu0 0.0
    %1481 = vmatpush1.msra.mxu0 0.0
    %1482 = vmatprep.subr.mxu0 0.0
    %1483 = vmatpush1.msra.mxu0 0.0
    %1484 = vmatprep.subr.mxu0 0.0
    %1485 = vmatpush1.msra.mxu0 0.0
    %1486 = vmatprep.subr.mxu0 0.0
    %1487 = vmatpush1.msra.mxu0 0.0
    %1488 = vmatprep.subr.mxu0 0.0
    %1489 = vmatpush1.msra.mxu0 0.0
    %1490 = vmatprep.subr.mxu0 0.0
    %1491 = vmatpush1.msra.mxu0 0.0
    %1492 = vmatprep.subr.mxu0 0.0
    %1493 = vmatpush1.msra.mxu0 0.0
    %1494 = vmatprep.subr.mxu0 0.0
    %1495 = vmatpush1.msra.mxu0 0.0
    %1496 = vmatprep.subr.mxu0 0.0
    %1497 = vmatpush1.msra.mxu0 0.0
    %1498 = vmatprep.subr.mxu0 0.0
    %1499 = vmatpush1.msra.mxu0 0.0
    %1500 = vmatprep.subr.mxu0 0.0
    %1501 = vmatpush1.msra.mxu0 0.0
    %1502 = vmatprep.subr.mxu0 0.0
    %1503 = vmatpush1.msra.mxu0 0.0
    %1504 = vmatprep.subr.mxu0 0.0
    %1505 = vmatpush1.msra.mxu0 0.0
    %1506 = vmatprep.mubr.f32.mxu0 0.0
    %1507 = vmatmul.mubr.f32.gmra.mrb[0].mxu0 %v1440
    %v1508 = vpop.f32.mrb[0].mxu0
    %v1509 = vadd.f32 0.0, %v1508
    %v1510 = vpop.f32.mrb[0].mxu0
    %1511 = vdwg.mxu0
    %v1512 = vadd.f32 %v909, %v1509
    %v1513 = vtanh.pop %v1512
    %v1514 = vld [vmem:[%s4] sm:$0xff]
    %v1515 = vld [vmem:[%s4 + $0x8] sm:$0xff]
    %v1516 = vld [vmem:[%s4 + $0x10] sm:$0xff]
    %v1517 = vld [vmem:[%s4 + $0x18] sm:$0xff]
    %v1518 = vld [vmem:[%s5] sm:$0x1]
    %v1520 = vlaneseq
    %v1521 = vshrl.u32 %v1520, 7
    %v1522 = vsub.s32 0, %v1521
    %v1523 = vrot.slane %v1518, %v1522
    %v1526 = vsel %vm57, %v1513, 0
    %1528 = vmatprep.subr.mxu0 0.0
    %1529 = vmatpush1.msra.mxu0 %v1514
    %1530 = vmatprep.subr.mxu0 0.0
    %1531 = vmatpush1.msra.mxu0 %v1515
    %1532 = vmatprep.subr.mxu0 0.0
    %1533 = vmatpush1.msra.mxu0 %v1516
    %1534 = vmatprep.subr.mxu0 0.0
    %1535 = vmatpush1.msra.mxu0 %v1517
    %1536 = vmatprep.subr.mxu0 0.0
    %1537 = vmatpush1.msra.mxu0 0.0
    %1538 = vmatprep.subr.mxu0 0.0
    %1539 = vmatpush1.msra.mxu0 0.0
    %1540 = vmatprep.subr.mxu0 0.0
    %1541 = vmatpush1.msra.mxu0 0.0
    %1542 = vmatprep.subr.mxu0 0.0
    %1543 = vmatpush1.msra.mxu0 0.0
    %1544 = vmatprep.subr.mxu0 0.0
    %1545 = vmatpush1.msra.mxu0 0.0
    %1546 = vmatprep.subr.mxu0 0.0
    %1547 = vmatpush1.msra.mxu0 0.0
    %1548 = vmatprep.subr.mxu0 0.0
    %1549 = vmatpush1.msra.mxu0 0.0
    %1550 = vmatprep.subr.mxu0 0.0
    %1551 = vmatpush1.msra.mxu0 0.0
    %1552 = vmatprep.subr.mxu0 0.0
    %1553 = vmatpush1.msra.mxu0 0.0
    %1554 = vmatprep.subr.mxu0 0.0
    %1555 = vmatpush1.msra.mxu0 0.0
    %1556 = vmatprep.subr.mxu0 0.0
    %1557 = vmatpush1.msra.mxu0 0.0
    %1558 = vmatprep.subr.mxu0 0.0
    %1559 = vmatpush1.msra.mxu0 0.0
    %1560 = vmatprep.subr.mxu0 0.0
    %1561 = vmatpush1.msra.mxu0 0.0
    %1562 = vmatprep.subr.mxu0 0.0
    %1563 = vmatpush1.msra.mxu0 0.0
    %1564 = vmatprep.subr.mxu0 0.0
    %1565 = vmatpush1.msra.mxu0 0.0
    %1566 = vmatprep.subr.mxu0 0.0
    %1567 = vmatpush1.msra.mxu0 0.0
    %1568 = vmatprep.subr.mxu0 0.0
    %1569 = vmatpush1.msra.mxu0 0.0
    %1570 = vmatprep.subr.mxu0 0.0
    %1571 = vmatpush1.msra.mxu0 0.0
    %1572 = vmatprep.subr.mxu0 0.0
    %1573 = vmatpush1.msra.mxu0 0.0
    %1574 = vmatprep.subr.mxu0 0.0
    %1575 = vmatpush1.msra.mxu0 0.0
    %1576 = vmatprep.subr.mxu0 0.0
    %1577 = vmatpush1.msra.mxu0 0.0
    %1578 = vmatprep.subr.mxu0 0.0
    %1579 = vmatpush1.msra.mxu0 0.0
    %1580 = vmatprep.subr.mxu0 0.0
    %1581 = vmatpush1.msra.mxu0 0.0
    %1582 = vmatprep.subr.mxu0 0.0
    %1583 = vmatpush1.msra.mxu0 0.0
    %1584 = vmatprep.subr.mxu0 0.0
    %1585 = vmatpush1.msra.mxu0 0.0
    %1586 = vmatprep.subr.mxu0 0.0
    %1587 = vmatpush1.msra.mxu0 0.0
    %1588 = vmatprep.subr.mxu0 0.0
    %1589 = vmatpush1.msra.mxu0 0.0
    %1590 = vmatprep.subr.mxu0 0.0
    %1591 = vmatpush1.msra.mxu0 0.0
    %1592 = vmatprep.mubr.f32.mxu0 0.0
    %1593 = vmatmul.mubr.f32.gmra.mrb[0].mxu0 %v990
    %v1594 = vpop.f32.mrb[0].mxu0
    %v1595 = vadd.f32 %v1523, %v1594
    %v1596 = vpop.f32.mrb[0].mxu0
    %1597 = vmatprep.mubr.f32.mxu0 0.0
    %1598 = vmatmul.mubr.f32.gmra.mrb[0].mxu0 %v1065
    %v1599 = vpop.f32.mrb[0].mxu0
    %v1600 = vadd.f32 %v1523, %v1599
    %v1601 = vpop.f32.mrb[0].mxu0
    %1602 = vmatprep.mubr.f32.mxu0 0.0
    %1603 = vmatmul.mubr.f32.gmra.mrb[0].mxu0 %v1140
    %v1604 = vpop.f32.mrb[0].mxu0
    %v1605 = vadd.f32 %v1523, %v1604
    %v1606 = vpop.f32.mrb[0].mxu0
    %1607 = vmatprep.mubr.f32.mxu0 0.0
    %1608 = vmatmul.mubr.f32.gmra.mrb[0].mxu0 %v1215
    %v1609 = vpop.f32.mrb[0].mxu0
    %v1610 = vadd.f32 %v1523, %v1609
    %v1611 = vpop.f32.mrb[0].mxu0
    %1612 = vmatprep.mubr.f32.mxu0 0.0
    %1613 = vmatmul.mubr.f32.gmra.mrb[0].mxu0 %v1290
    %v1614 = vpop.f32.mrb[0].mxu0
    %v1615 = vadd.f32 %v1523, %v1614
    %v1616 = vpop.f32.mrb[0].mxu0
    %1617 = vmatprep.mubr.f32.mxu0 0.0
    %1618 = vmatmul.mubr.f32.gmra.mrb[0].mxu0 %v1365
    %v1619 = vpop.f32.mrb[0].mxu0
    %v1620 = vadd.f32 %v1523, %v1619
    %v1621 = vpop.f32.mrb[0].mxu0
    %1622 = vmatprep.mubr.f32.mxu0 0.0
    %1623 = vmatmul.mubr.f32.gmra.mrb[0].mxu0 %v1440
    %v1624 = vpop.f32.mrb[0].mxu0
    %v1625 = vadd.f32 %v1523, %v1624
    %v1626 = vpop.f32.mrb[0].mxu0
    %1627 = vmatprep.mubr.f32.mxu0 0.0
    %1628 = vmatmul.mubr.f32.gmra.mrb[0].mxu0 %v1526
    %v1629 = vpop.f32.mrb[0].mxu0
    %v1630 = vadd.f32 %v1523, %v1629
    %v1631 = vpop.f32.mrb[0].mxu0
    %1632 = vdwg.mxu0
    %1633 = vst [vmem:[#allocation5] sm:$0xff] %v1595
    %1634 = vst [vmem:[#allocation5 + $0x8] sm:$0xff] %v1600
    %1635 = vst [vmem:[#allocation5 + $0x10] sm:$0xff] %v1605
    %1636 = vst [vmem:[#allocation5 + $0x18] sm:$0xff] %v1610
    %1637 = vst [vmem:[#allocation5 + $0x20] sm:$0xff] %v1615
    %1638 = vst [vmem:[#allocation5 + $0x28] sm:$0xff] %v1620
    %1639 = vst [vmem:[#allocation5 + $0x30] sm:$0xff] %v1625
    %1640 = vst [vmem:[#allocation5 + $0x38] sm:$0xff] %v1630
    // Predicated region
    $region30: #{tpu_custom_call.1} parent=1 // pred_check
      _
    $region31: #{tpu_custom_call.1} parent=1 // pred_check_branch
      %1642 = sbr.rel (0) target = $region33
    $region32: #{tpu_custom_call.1} parent=1 // pred_region
      %s1644 = ssub.s32 1024, 1024
      %1645 = vsyncadd [#allocation4], %s1644
      %s1646 = sshll.u32 [#allocation5], 4
      %s1647 = int_to_ptr.vmem [resolvable:$true] %s1646
      %1652 = dma.vmem_to_hbm [thread:$0]  %s1647, 1024, %s6, [#allocation4], 128, 128, 8
    $region33: #{tpu_custom_call.1} parent=1 // pred_fallthru
      _
    // Predicated region
    $region34: #{tpu_custom_call.1} parent=1 // pred_check
      _
    $region35: #{tpu_custom_call.1} parent=1 // pred_check_branch
      %1654 = sbr.rel (0) target = $region37
    $region36: #{tpu_custom_call.1} parent=1 // pred_region
      %1655 = dma.done [#allocation4], 1024
    $region37: #{tpu_custom_call.1} parent=1 // pred_fallthru
      _
    %1656 = vsyncpa [#allocation3], 1
    %1657 = vsyncpa [#allocation4], 1

</llo_original>
